<compile_context>
chip_gen: v7x
topology: tpu7x:2x2x1
jax: 0.10.0
libtpu: 0.0.40
codegen_flags: <defaults>
</compile_context>

<pallas_src>
import jax
import jax.numpy as jnp
from jax.experimental import pallas as pl
from jax.experimental.pallas import tpu as pltpu

# --- EDM parameters (standard Karras et al. values) -------------------------
SIGMA_DATA = 0.5
P_MEAN = -1.2
P_STD = 1.2


def diffusion_inpaint_kernel(x0_ref, mask_ref, noise_ref, sigma_ref,
                             w1_ref, tw_ref, b1_ref, w2_ref, b2_ref,
                             pred_ref, stats_ref, zm_ref):
    """One batch-block of the fused training step.

    Inputs (per grid step i over the batch):
      x0_ref                     : (BM, T)  f32   clean signal
      mask_ref                   : (BM, T)  bf16  {0,1}, 1 = observed
      noise_ref                  : (BM, T)  bf16  unit normals
      sigma_ref                  : (BM, 1)  f32   positive noise level ("time")
      w1_ref (2T, H) bf16, w2_ref (H, T) bf16, tw/b1 (1, H) f32, b2 (1, T) f32
    Outputs:
      pred_ref  : (BM, T)   f32  denoised prediction (net_d output)
      stats_ref : (BM, 128) f32  lane 0: loss_weight * sum(~m*(pred-x0))^2
                                 lane 1: sum(~mask)   (finalized in wrapper)
    Scratch:
      zm_ref    : (BM, 2T)  bf16 persistent buffer for the fused MLP input
    """
    T = x0_ref.shape[1]

    x0 = x0_ref[...]
    mask_bf = mask_ref[...]                       # bf16 {0,1}
    mask = mask_bf.astype(jnp.float32)
    nrm = noise_ref[...].astype(jnp.float32)
    sigma = sigma_ref[...]                        # (BM, 1)

    inv_mask = 1.0 - mask                         # torch's ~mask

    # --- train(): corrupt the unobserved region ---
    x_i = x0 + inv_mask * (nrm * sigma)
    y = mask * x0                                 # observed signal; mask*y == y

    # --- net_d(): EDM preconditioning (f32) ---
    sd2 = SIGMA_DATA * SIGMA_DATA
    denom = sigma * sigma + sd2                   # (BM, 1)
    c_in = jax.lax.rsqrt(denom)
    c_out = sigma * SIGMA_DATA * c_in
    c_skip = sd2 / denom
    c_noise = 0.25 * jnp.log(sigma)

    z = c_in * (y + inv_mask * x_i)               # mask*y + ~mask*x_i == y + ~mask*x_i

    # --- net_f(concat([z, mask]), time=c_noise): fused 2-layer MLP ---
    # Build the (BM, 2T) bf16 input in persistent VMEM scratch (two aligned
    # lane-slice stores) instead of jnp.concatenate -> no per-step relayout.
    zm_ref[:, :T] = z.astype(jnp.bfloat16)
    zm_ref[:, T:] = mask_bf
    h = jnp.dot(zm_ref[...], w1_ref[...], preferred_element_type=jnp.float32)  # (BM,H)
    h = jnp.tanh(h + c_noise * tw_ref[...] + b1_ref[...])
    net_out = jnp.dot(h.astype(jnp.bfloat16), w2_ref[...],
                      preferred_element_type=jnp.float32) + b2_ref[...]        # (BM,T)

    # --- skip connection + masked mix (f32) ---
    xhat_full = c_skip * x_i + c_out * net_out
    pred = y + inv_mask * xhat_full
    pred_ref[...] = pred

    # --- weighted masked MSE: per-row partial sums, packed lane-dense ---
    loss_weight = denom / ((sigma * SIGMA_DATA) ** 2)        # (BM, 1) == 1/c_out^2
    err = inv_mask * (pred - x0)
    num = jnp.sum(err * err, axis=1, keepdims=True) * loss_weight   # (BM, 1)
    den = jnp.sum(inv_mask, axis=1, keepdims=True)                  # (BM, 1)
    lane = jax.lax.broadcasted_iota(jnp.int32, stats_ref.shape, 1)
    stats_ref[...] = jnp.where(lane == 0, num, jnp.where(lane == 1, den, 0.0))


def _pick_block_b(B):
    """Batch block: multiple of 16 (bf16 sublanes); 256 rows for big batches
    (full MXU M on v6e/v7x); >= 2 grid steps when possible (v7x has 2 TCs)."""
    if B % 512 == 0:
        return 256
    if B % 32 == 0:
        return B // 2
    return B


def diffusion_inpaint_forward(x0, mask_bool, noise_n, sigma, params, *, block_b=None):
    """x0: (B, 1, T); mask_bool: (B, T) bool; noise_n: (B, 1, T); sigma: (B,)."""
    B, C, T = x0.shape
    assert C == 1
    H = params["w2"].shape[0]
    assert T % 128 == 0 and H % 128 == 0, "T, H must be lane-aligned (x128)"

    if block_b is None:
        block_b = _pick_block_b(B)
    assert B % block_b == 0, "batch must be a multiple of the batch block"
    assert block_b % 8 == 0, "batch block must be a multiple of 8 (ideally 16)"
    grid_b = B // block_b

    x0_2d = x0[:, 0, :].astype(jnp.float32)
    noise_2d = noise_n[:, 0, :].astype(jnp.bfloat16)       # bf16: halves HBM bytes
    mask_f = mask_bool.astype(jnp.bfloat16)                # bf16 {0,1}: halves bytes
    sigma_2d = sigma.astype(jnp.float32)[:, None]          # (B, 1)

    # Fused first-layer weight (2T, H) and bf16 matmul operands (free in wrapper).
    w1 = jnp.concatenate([params["w1z"], params["w1m"]], axis=0).astype(jnp.bfloat16)
    w2 = params["w2"].astype(jnp.bfloat16)
    tw = params["tw"].astype(jnp.float32)
    b1 = params["b1"].astype(jnp.float32)
    b2 = params["b2"].astype(jnp.float32)

    def row_spec(bm, n):          # batch-blocked activations / outputs
        return pl.BlockSpec((bm, n), lambda i: (i, 0))

    def resident(shape):          # weights: same block every step -> stays in VMEM
        return pl.BlockSpec(shape, lambda i: (0, 0))

    grid_spec = pltpu.PrefetchScalarGridSpec(
        num_scalar_prefetch=0,
        grid=(grid_b,),
        in_specs=[
            row_spec(block_b, T),        # x0      (f32)
            row_spec(block_b, T),        # mask    (bf16)
            row_spec(block_b, T),        # noise   (bf16)
            row_spec(block_b, 1),        # sigma   (f32)
            resident((2 * T, H)),        # w1 (bf16, fused [w1z; w1m])
            resident((1, H)),            # tw
            resident((1, H)),            # b1
            resident((H, T)),            # w2 (bf16)
            resident((1, T)),            # b2
        ],
        out_specs=(
            row_spec(block_b, T),        # pred
            row_spec(block_b, 128),      # stats (lane 0 = num, lane 1 = den)
        ),
        scratch_shapes=[pltpu.VMEM((block_b, 2 * T), jnp.bfloat16)],   # zm buffer
    )

    # Cost hint: two matmuls dominate flops; tanh dominates transcendentals.
    flops = 2 * B * (2 * T * H) + 2 * B * (H * T)
    transcendentals = B * H + 2 * B
    bytes_accessed = (
        B * T * (4 + 2 + 2)                    # x0 f32, mask bf16, noise bf16 in
        + B * 4                                # sigma
        + (2 * T * H + H * T) * 2              # bf16 weights
        + (2 * H + T) * 4                      # tw, b1, b2
        + B * T * 4                            # pred out
        + B * 128 * 4                          # stats out
    )
    cost = pl.CostEstimate(flops=flops, transcendentals=transcendentals,
                           bytes_accessed=bytes_accessed)

    # VMEM budget (double-buffered activations + 2x weights + scratch), capped
    # at 48 MiB so the resident-weight strategy stays inside v7x's 64 MiB/TC.
    block_bytes = (
        2 * (block_b * T * (4 + 2 + 2) + block_b * 4)              # in blocks x2
        + 2 * (block_b * T * 4 + block_b * 128 * 4)                # out blocks x2
        + 2 * ((2 * T * H + H * T) * 2 + (2 * H + T) * 4)          # weights x2
        + block_b * 2 * T * 2                                      # zm scratch
    )
    vmem_limit = int(min(48 * 1024 * 1024, max(32 * 1024 * 1024, 2 * block_bytes)))

    pred, stats = pl.pallas_call(
        diffusion_inpaint_kernel,
        grid_spec=grid_spec,
        out_shape=(
            jax.ShapeDtypeStruct((B, T), jnp.float32),
            jax.ShapeDtypeStruct((B, 128), jnp.float32),
        ),
        compiler_params=pltpu.CompilerParams(
            dimension_semantics=("parallel",),       # batch blocks independent (v7x 2-TC)
            vmem_limit_bytes=vmem_limit,
        ),
        cost_estimate=cost,
    )(x0_2d, mask_f, noise_2d, sigma_2d, w1, tw, b1, w2, b2)

    # Trivial second pass: sum/sum == mean/mean, with an eps guard against a
    # fully-observed batch (inv_mask all zero).
    loss = jnp.sum(stats[:, 0]) / jnp.maximum(jnp.sum(stats[:, 1]), 1e-12)
    return loss, pred[:, None, :]


def init_params(key, T, H):
    k1, k2, k3, k4 = jax.random.split(key, 4)
    scale = 0.1
    return {
        "w1z": scale * jax.random.normal(k1, (T, H), jnp.float32),
        "w1m": scale * jax.random.normal(k2, (T, H), jnp.float32),
        "tw":  scale * jax.random.normal(k3, (1, H), jnp.float32),
        "b1":  jnp.zeros((1, H), jnp.float32),
        "w2":  scale * jax.random.normal(k4, (H, T), jnp.float32),
        "b2":  jnp.zeros((1, T), jnp.float32),
    }


if __name__ == "__main__":
    # Small but alignment-friendly shapes: B multiple of 32 (-> block_b=16,
    # grid of 2 so both v7x TCs get a block), T/H multiples of 256 (full MXU
    # width on v6e/v7x, two passes on v5e's 128-wide MXU).
    B, T, H = 32, 256, 256
    root = jax.random.PRNGKey(0)
    k_x0, k_time, k_noise, k_params = jax.random.split(root, 4)

    # x0: clean signal (B, 1, T)
    x0 = jax.random.normal(k_x0, (B, 1, T), jnp.float32)

    # time ~ normal_samples_to_time(randn(B)) = exp(P_MEAN + P_STD * n)
    t_normal = jax.random.normal(k_time, (B,), jnp.float32)
    sigma = jnp.exp(P_MEAN + P_STD * t_normal)

    # mask generator: deterministic span mask — first half observed
    mask_bool = jnp.concatenate(
        [jnp.ones((B, T // 2), jnp.bool_), jnp.zeros((B, T - T // 2), jnp.bool_)],
        axis=1)

    # noise ~ randn_like(x0) (scaled by sigma inside the kernel)
    noise_n = jax.random.normal(k_noise, (B, 1, T), jnp.float32)

    params = init_params(k_params, T, H)

    loss, pred = diffusion_inpaint_forward(x0, mask_bool, noise_n, sigma, params)
    jax.block_until_ready((loss, pred))
    assert pred.shape == (B, 1, T)
    assert jnp.isfinite(loss)
    print("KERNEL_OK")
</pallas_src>

<mosaic_0001>
module attributes {stable_mosaic.version = 11 : i64} {
  func.func @diffusion_inpaint_kernel(%arg0: i32, %arg1: memref<16x256xf32, #tpu.memory_space<vmem>>, %arg2: memref<16x256xbf16, #tpu.memory_space<vmem>>, %arg3: memref<16x256xbf16, #tpu.memory_space<vmem>>, %arg4: memref<16x1xf32, #tpu.memory_space<vmem>>, %arg5: memref<512x256xbf16, #tpu.memory_space<vmem>>, %arg6: memref<1x256xf32, #tpu.memory_space<vmem>>, %arg7: memref<1x256xf32, #tpu.memory_space<vmem>>, %arg8: memref<256x256xbf16, #tpu.memory_space<vmem>>, %arg9: memref<1x256xf32, #tpu.memory_space<vmem>>, %arg10: memref<16x256xf32, #tpu.memory_space<vmem>>, %arg11: memref<16x128xf32, #tpu.memory_space<vmem>>, %arg12: memref<16x512xbf16, #tpu.memory_space<vmem>>) attributes {dimension_semantics = [#tpu.dimension_semantics<parallel>], iteration_bounds = array<i64: 2>, scalar_prefetch = 0 : i64, scratch_operands = 1 : i64, tpu.core_type = #tpu.core_type<tc>, window_params = [{transform_indices = @transform_0, window_bounds = array<i64: 16, 256>}, {transform_indices = @transform_1, window_bounds = array<i64: 16, 256>}, {transform_indices = @transform_2, window_bounds = array<i64: 16, 256>}, {transform_indices = @transform_3, window_bounds = array<i64: 16, 1>}, {pipeline_mode = #tpu.pipeline_mode<synchronous>, transform_indices = @transform_4, window_bounds = array<i64: 512, 256>}, {pipeline_mode = #tpu.pipeline_mode<synchronous>, transform_indices = @transform_5, window_bounds = array<i64: 1, 256>}, {pipeline_mode = #tpu.pipeline_mode<synchronous>, transform_indices = @transform_6, window_bounds = array<i64: 1, 256>}, {pipeline_mode = #tpu.pipeline_mode<synchronous>, transform_indices = @transform_7, window_bounds = array<i64: 256, 256>}, {pipeline_mode = #tpu.pipeline_mode<synchronous>, transform_indices = @transform_8, window_bounds = array<i64: 1, 256>}, {transform_indices = @transform_9, window_bounds = array<i64: 16, 256>}, {transform_indices = @transform_10, window_bounds = array<i64: 16, 128>}]} {
    %c0 = arith.constant 0 : index
    %c0_0 = arith.constant 0 : index
    %0 = vector.load %arg1[%c0, %c0_0] : memref<16x256xf32, #tpu.memory_space<vmem>>, vector<16x256xf32>
    %c0_1 = arith.constant 0 : index
    %c0_2 = arith.constant 0 : index
    %1 = vector.load %arg2[%c0_1, %c0_2] : memref<16x256xbf16, #tpu.memory_space<vmem>>, vector<16x256xbf16>
    %2 = arith.extf %1 : vector<16x256xbf16> to vector<16x256xf32>
    %c0_3 = arith.constant 0 : index
    %c0_4 = arith.constant 0 : index
    %3 = vector.load %arg3[%c0_3, %c0_4] : memref<16x256xbf16, #tpu.memory_space<vmem>>, vector<16x256xbf16>
    %4 = arith.extf %3 : vector<16x256xbf16> to vector<16x256xf32>
    %c0_5 = arith.constant 0 : index
    %c0_6 = arith.constant 0 : index
    %5 = vector.load %arg4[%c0_5, %c0_6] : memref<16x1xf32, #tpu.memory_space<vmem>>, vector<16x1xf32>
    %cst = arith.constant 1.000000e+00 : f32
    %6 = vector.broadcast %cst : f32 to vector<16x256xf32>
    %7 = arith.subf %6, %2 : vector<16x256xf32>
    %8 = vector.broadcast %5 : vector<16x1xf32> to vector<16x256xf32>
    %9 = arith.mulf %4, %8 : vector<16x256xf32>
    %10 = arith.mulf %7, %9 : vector<16x256xf32>
    %11 = arith.addf %0, %10 : vector<16x256xf32>
    %12 = arith.mulf %2, %0 : vector<16x256xf32>
    %13 = arith.mulf %5, %5 : vector<16x1xf32>
    %cst_7 = arith.constant 2.500000e-01 : f32
    %14 = vector.broadcast %cst_7 : f32 to vector<16x1xf32>
    %15 = arith.addf %13, %14 : vector<16x1xf32>
    %16 = math.rsqrt %15 : vector<16x1xf32>
    %cst_8 = arith.constant 5.000000e-01 : f32
    %17 = vector.broadcast %cst_8 : f32 to vector<16x1xf32>
    %18 = arith.mulf %5, %17 : vector<16x1xf32>
    %19 = arith.mulf %18, %16 : vector<16x1xf32>
    %cst_9 = arith.constant 2.500000e-01 : f32
    %20 = vector.broadcast %cst_9 : f32 to vector<16x1xf32>
    %21 = arith.divf %20, %15 : vector<16x1xf32>
    %22 = math.log %5 : vector<16x1xf32>
    %cst_10 = arith.constant 2.500000e-01 : f32
    %23 = vector.broadcast %cst_10 : f32 to vector<16x1xf32>
    %24 = arith.mulf %23, %22 : vector<16x1xf32>
    %25 = arith.mulf %7, %11 : vector<16x256xf32>
    %26 = arith.addf %12, %25 : vector<16x256xf32>
    %27 = vector.broadcast %16 : vector<16x1xf32> to vector<16x256xf32>
    %28 = arith.mulf %27, %26 : vector<16x256xf32>
    %29 = arith.truncf %28 : vector<16x256xf32> to vector<16x256xbf16>
    %c0_11 = arith.constant 0 : index
    %c0_12 = arith.constant 0 : index
    %30 = vector.load %arg12[%c0_11, %c0_12] : memref<16x512xbf16, #tpu.memory_space<vmem>>, vector<16x256xbf16>
    tpu.vector_store %arg12[%c0_11, %c0_12], %29 {strides = array<i32>} : memref<16x512xbf16, #tpu.memory_space<vmem>>, vector<16x256xbf16>,
    %c0_13 = arith.constant 0 : index
    %c256 = arith.constant 256 : index
    %31 = vector.load %arg12[%c0_13, %c256] : memref<16x512xbf16, #tpu.memory_space<vmem>>, vector<16x256xbf16>
    tpu.vector_store %arg12[%c0_13, %c256], %1 {strides = array<i32>} : memref<16x512xbf16, #tpu.memory_space<vmem>>, vector<16x256xbf16>,
    %c0_14 = arith.constant 0 : index
    %c0_15 = arith.constant 0 : index
    %32 = vector.load %arg12[%c0_14, %c0_15] : memref<16x512xbf16, #tpu.memory_space<vmem>>, vector<16x512xbf16>
    %c0_16 = arith.constant 0 : index
    %c0_17 = arith.constant 0 : index
    %33 = vector.load %arg5[%c0_16, %c0_17] : memref<512x256xbf16, #tpu.memory_space<vmem>>, vector<512x256xbf16>
    %cst_18 = arith.constant dense<0.000000e+00> : vector<16x256xf32>
    %34 = tpu.matmul %32, %33, %cst_18 {dimension_numbers = #tpu.dot_dimension_numbers<[1], [0], [0], [1], [0, 0, 1, 1], [], []>} : vector<16x512xbf16>, vector<512x256xbf16>, vector<16x256xf32> -> vector<16x256xf32>
    %c0_19 = arith.constant 0 : index
    %c0_20 = arith.constant 0 : index
    %35 = vector.load %arg6[%c0_19, %c0_20] : memref<1x256xf32, #tpu.memory_space<vmem>>, vector<1x256xf32>
    %36 = vector.broadcast %24 : vector<16x1xf32> to vector<16x256xf32>
    %37 = vector.broadcast %35 : vector<1x256xf32> to vector<16x256xf32>
    %38 = arith.mulf %36, %37 : vector<16x256xf32>
    %39 = arith.addf %34, %38 : vector<16x256xf32>
    %c0_21 = arith.constant 0 : index
    %c0_22 = arith.constant 0 : index
    %40 = vector.load %arg7[%c0_21, %c0_22] : memref<1x256xf32, #tpu.memory_space<vmem>>, vector<1x256xf32>
    %41 = vector.broadcast %40 : vector<1x256xf32> to vector<16x256xf32>
    %42 = arith.addf %39, %41 : vector<16x256xf32>
    %43 = math.tanh %42 : vector<16x256xf32>
    %44 = arith.truncf %43 : vector<16x256xf32> to vector<16x256xbf16>
    %c0_23 = arith.constant 0 : index
    %c0_24 = arith.constant 0 : index
    %45 = vector.load %arg8[%c0_23, %c0_24] : memref<256x256xbf16, #tpu.memory_space<vmem>>, vector<256x256xbf16>
    %cst_25 = arith.constant dense<0.000000e+00> : vector<16x256xf32>
    %46 = tpu.matmul %44, %45, %cst_25 {dimension_numbers = #tpu.dot_dimension_numbers<[1], [0], [0], [1], [0, 0, 1, 1], [], []>} : vector<16x256xbf16>, vector<256x256xbf16>, vector<16x256xf32> -> vector<16x256xf32>
    %c0_26 = arith.constant 0 : index
    %c0_27 = arith.constant 0 : index
    %47 = vector.load %arg9[%c0_26, %c0_27] : memref<1x256xf32, #tpu.memory_space<vmem>>, vector<1x256xf32>
    %48 = vector.broadcast %47 : vector<1x256xf32> to vector<16x256xf32>
    %49 = arith.addf %46, %48 : vector<16x256xf32>
    %50 = vector.broadcast %21 : vector<16x1xf32> to vector<16x256xf32>
    %51 = arith.mulf %50, %11 : vector<16x256xf32>
    %52 = vector.broadcast %19 : vector<16x1xf32> to vector<16x256xf32>
    %53 = arith.mulf %52, %49 : vector<16x256xf32>
    %54 = arith.addf %51, %53 : vector<16x256xf32>
    %55 = arith.mulf %7, %54 : vector<16x256xf32>
    %56 = arith.addf %12, %55 : vector<16x256xf32>
    %c0_28 = arith.constant 0 : index
    %c0_29 = arith.constant 0 : index
    %57 = vector.load %arg10[%c0_28, %c0_29] : memref<16x256xf32, #tpu.memory_space<vmem>>, vector<16x256xf32>
    tpu.vector_store %arg10[%c0_28, %c0_29], %56 {strides = array<i32>} : memref<16x256xf32, #tpu.memory_space<vmem>>, vector<16x256xf32>,
    %cst_30 = arith.constant 5.000000e-01 : f32
    %58 = vector.broadcast %cst_30 : f32 to vector<16x1xf32>
    %59 = arith.mulf %5, %58 : vector<16x1xf32>
    %60 = arith.mulf %59, %59 : vector<16x1xf32>
    %61 = arith.divf %15, %60 : vector<16x1xf32>
    %62 = arith.subf %56, %0 : vector<16x256xf32>
    %63 = arith.mulf %7, %62 : vector<16x256xf32>
    %64 = arith.mulf %63, %63 : vector<16x256xf32>
    %cst_31 = arith.constant dense<0.000000e+00> : vector<16xf32>
    %65 = vector.multi_reduction <add>, %64, %cst_31 [1] : vector<16x256xf32> to vector<16xf32>
    %66 = vector.shape_cast %65 : vector<16xf32> to vector<16x1xf32>
    %67 = arith.mulf %66, %61 : vector<16x1xf32>
    %cst_32 = arith.constant dense<0.000000e+00> : vector<16xf32>
    %68 = vector.multi_reduction <add>, %7, %cst_32 [1] : vector<16x256xf32> to vector<16xf32>
    %69 = vector.shape_cast %68 : vector<16xf32> to vector<16x1xf32>
    %70 = tpu.iota {dimensions = array<i32: 1>} : vector<16x128xi32>
    %c0_i32 = arith.constant 0 : i32
    %71 = vector.broadcast %c0_i32 : i32 to vector<16x128xi32>
    %72 = arith.cmpi eq, %70, %71 : vector<16x128xi32>
    %c1_i32 = arith.constant 1 : i32
    %73 = vector.broadcast %c1_i32 : i32 to vector<16x128xi32>
    %74 = arith.cmpi eq, %70, %73 : vector<16x128xi32>
    %cst_33 = arith.constant 0.000000e+00 : f32
    %75 = vector.shape_cast %69 : vector<16x1xf32> to vector<16x1xf32>
    %76 = vector.broadcast %75 : vector<16x1xf32> to vector<16x128xf32>
    %77 = vector.broadcast %cst_33 : f32 to vector<16x128xf32>
    %78 = arith.select %74, %76, %77 : vector<16x128xi1>, vector<16x128xf32>
    %79 = vector.shape_cast %67 : vector<16x1xf32> to vector<16x1xf32>
    %80 = vector.broadcast %79 : vector<16x1xf32> to vector<16x128xf32>
    %81 = arith.select %72, %80, %78 : vector<16x128xi1>, vector<16x128xf32>
    %c0_34 = arith.constant 0 : index
    %c0_35 = arith.constant 0 : index
    %82 = vector.load %arg11[%c0_34, %c0_35] : memref<16x128xf32, #tpu.memory_space<vmem>>, vector<16x128xf32>
    tpu.vector_store %arg11[%c0_34, %c0_35], %81 {strides = array<i32>} : memref<16x128xf32, #tpu.memory_space<vmem>>, vector<16x128xf32>,
    return
  }
  func.func @transform_0(%arg0: i32) -> (i32, i32) {
    %c0_i32 = arith.constant 0 : i32
    %c0_i32_0 = arith.constant 0 : i32
    return %arg0, %c0_i32 : i32, i32
  }
  func.func @transform_1(%arg0: i32) -> (i32, i32) {
    %c0_i32 = arith.constant 0 : i32
    %c0_i32_0 = arith.constant 0 : i32
    return %arg0, %c0_i32 : i32, i32
  }
  func.func @transform_2(%arg0: i32) -> (i32, i32) {
    %c0_i32 = arith.constant 0 : i32
    %c0_i32_0 = arith.constant 0 : i32
    return %arg0, %c0_i32 : i32, i32
  }
  func.func @transform_3(%arg0: i32) -> (i32, i32) {
    %c0_i32 = arith.constant 0 : i32
    %c0_i32_0 = arith.constant 0 : i32
    return %arg0, %c0_i32 : i32, i32
  }
  func.func @transform_4(%arg0: i32) -> (i32, i32) {
    %c0_i32 = arith.constant 0 : i32
    %c0_i32_0 = arith.constant 0 : i32
    %c0_i32_1 = arith.constant 0 : i32
    return %c0_i32, %c0_i32_0 : i32, i32
  }
  func.func @transform_5(%arg0: i32) -> (i32, i32) {
    %c0_i32 = arith.constant 0 : i32
    %c0_i32_0 = arith.constant 0 : i32
    %c0_i32_1 = arith.constant 0 : i32
    return %c0_i32, %c0_i32_0 : i32, i32
  }
  func.func @transform_6(%arg0: i32) -> (i32, i32) {
    %c0_i32 = arith.constant 0 : i32
    %c0_i32_0 = arith.constant 0 : i32
    %c0_i32_1 = arith.constant 0 : i32
    return %c0_i32, %c0_i32_0 : i32, i32
  }
  func.func @transform_7(%arg0: i32) -> (i32, i32) {
    %c0_i32 = arith.constant 0 : i32
    %c0_i32_0 = arith.constant 0 : i32
    %c0_i32_1 = arith.constant 0 : i32
    return %c0_i32, %c0_i32_0 : i32, i32
  }
  func.func @transform_8(%arg0: i32) -> (i32, i32) {
    %c0_i32 = arith.constant 0 : i32
    %c0_i32_0 = arith.constant 0 : i32
    %c0_i32_1 = arith.constant 0 : i32
    return %c0_i32, %c0_i32_0 : i32, i32
  }
  func.func @transform_9(%arg0: i32) -> (i32, i32) {
    %c0_i32 = arith.constant 0 : i32
    %c0_i32_0 = arith.constant 0 : i32
    return %arg0, %c0_i32 : i32, i32
  }
  func.func @transform_10(%arg0: i32) -> (i32, i32) {
    %c0_i32 = arith.constant 0 : i32
    %c0_i32_0 = arith.constant 0 : i32
    return %arg0, %c0_i32 : i32, i32
  }
}

</mosaic_0001>

<llo_original>
// kernel: tpu_custom_call.1
$region0: #{tpu_custom_call.1}
  #allocation0 [shape = 'u32[]', space=smem, size = 0x4, offset = 0x4, fixed_abs, tag = 'smem constant byte address 0x4 - core index']
  #allocation1 [shape = 'u32[144,128]{1,0:T(1,128)}', space=vmem, size = 0x12000, scoped, tag = 'internal scratch']
  #allocation2 [shape = 'bf16[16,512]{1,0:T(16,128)(2,1)}', space=vmem, size = 0x4000, scoped, tag = 'scratch operand']
  %s0 = inlined_call_operand.hbm [shape: f32[32,256], index: 0, kind: input, shape index: {}]
  %s1 = inlined_call_operand.vmem [shape: bf16[32,256], index: 1, kind: input, shape index: {}]
  %s2 = inlined_call_operand.hbm [shape: bf16[32,256], index: 2, kind: input, shape index: {}]
  %s3 = inlined_call_operand.vmem [shape: f32[32,1], index: 3, kind: input, shape index: {}]
  %s4 = inlined_call_operand.hbm [shape: bf16[512,256], index: 4, kind: input, shape index: {}]
  %s5 = inlined_call_operand.vmem [shape: f32[1,256], index: 5, kind: input, shape index: {}]
  %s6 = inlined_call_operand.vmem [shape: f32[1,256], index: 6, kind: input, shape index: {}]
  %s7 = inlined_call_operand.hbm [shape: bf16[256,256], index: 7, kind: input, shape index: {}]
  %s8 = inlined_call_operand.vmem [shape: f32[1,256], index: 8, kind: input, shape index: {}]
  %s9 = inlined_call_operand.hbm [shape: f32[32,256], index: 9, kind: output, shape index: {0}]
  %s10 = inlined_call_operand.hbm [shape: f32[32,128], index: 10, kind: output, shape index: {1}]
  %11 = xla_tuple %s9, %s10
  %s12 = sld [smem:[#allocation0]]
  $region93: #{tpu_custom_call.1} parent=0
    _
  %s14 = ssub.s32 1, %s12
  %s15 = scalar_select 0, %s14, %s12
  $region1: #{tpu_custom_call.1} parent=0
    #allocation3 [shape = 'u8[32768]{0}', space=vmem, size = 0x8000, scoped, tag = 'input window, operand 0']
    #allocation4 [shape = 's32[2]{0}', space=sflag, size = 0x8, scoped, tag = 'scoped memory for tpu_custom_call.1']
    #allocation5 [shape = 's32[2]{0}', space=sflag, size = 0x8, scoped, tag = 'scoped memory for tpu_custom_call.1']
    #allocation6 [shape = 'u8[16384]{0}', space=vmem, size = 0x4000, scoped, tag = 'input window, operand 2']
    #allocation7 [shape = 's32[2]{0}', space=sflag, size = 0x8, scoped, tag = 'scoped memory for tpu_custom_call.1']
    #allocation8 [shape = 'u8[262144]{0}', space=vmem, size = 0x40000, scoped, tag = 'input window, operand 4, single buffered']
    #allocation9 [shape = 'u8[131072]{0}', space=vmem, size = 0x20000, scoped, tag = 'input window, operand 7, single buffered']
    #allocation10 [shape = 's32[1]{0}', space=sflag, size = 0x4, scoped, tag = 'scoped memory for tpu_custom_call.1']
    #allocation11 [shape = 'u8[32768]{0}', space=vmem, size = 0x8000, scoped, tag = 'output window, operand 0']
    #allocation12 [shape = 'u8[16384]{0}', space=vmem, size = 0x4000, scoped, tag = 'output window, operand 1']
    #allocation13 [shape = 's32[2]{0}', space=sflag, size = 0x8, scoped, tag = 'scoped memory for tpu_custom_call.1']
    %16 = vsyncpa [#allocation4], 0
    %s17 = scalar_lea.sflag [#allocation4], 1
    %18 = vsyncpa %s17, 0
    %19 = vsyncpa [#allocation7], 0
    %s20 = scalar_lea.sflag [#allocation7], 1
    %21 = vsyncpa %s20, 0
    %22 = vsyncpa [#allocation10], 0
    %23 = vsyncpa [#allocation5], 0
    %s24 = scalar_lea.sflag [#allocation5], 1
    %25 = vsyncpa %s24, 0
    %26 = vsyncpa [#allocation13], 0
    %s27 = scalar_lea.sflag [#allocation13], 1
    %28 = vsyncpa %s27, 0
    loop: start=0, step=1, limit=4
    $region2: #{tpu_custom_call.1} parent=1 // loop_pre_header
      _
    $region3: #{tpu_custom_call.1} parent=1 // loop_header
      %s30 = sphi 0, %s34
      %p31 = scmp.ge.s32.totalorder %s30, 4
      %s40 = sphi 0, %s42
      %s43 = sphi 0, %s40
      %s44 = sphi 0, %s43
      %s60 = sphi 0, %s44
      %s66 = sphi 0, %s68
      %s69 = sphi 0, %s66
      %s70 = sphi 0, %s69
      %s86 = sphi 0, %s70
      %s92 = sphi 0, %s94
      %s95 = sphi 0, %s92
      %s96 = sphi 0, %s95
      %s112 = sphi 0, %s96
      %s118 = sphi 0, %s120
      %s121 = sphi 0, %s118
      %s122 = sphi 0, %s121
      %s138 = sphi 0, %s122
      %s142 = sphi 0, %s142
      %s144 = sphi 0, %s142
      %s145 = sphi 0, %s144
      %s159 = sphi 0, %s145
      %s163 = sphi 0, %s163
      %s165 = sphi 0, %s163
      %s166 = sphi 0, %s165
      %s180 = sphi 0, %s166
      %s184 = sphi 0, %s184
      %s186 = sphi 0, %s184
      %s187 = sphi 0, %s186
      %s201 = sphi 0, %s187
      %s205 = sphi 0, %s205
      %s207 = sphi 0, %s205
      %s208 = sphi 0, %s207
      %s222 = sphi 0, %s208
      %s226 = sphi 0, %s226
      %s228 = sphi 0, %s226
      %s229 = sphi 0, %s228
      %s243 = sphi 0, %s229
      %s249 = sphi 0, %s251
      %s252 = sphi 0, %s249
      %s253 = sphi 0, %s252
      %s269 = sphi 0, %s253
      %s275 = sphi 0, %s277
      %s278 = sphi 0, %s275
      %s279 = sphi 0, %s278
      %s295 = sphi 0, %s279
    $region4: #{tpu_custom_call.1} parent=1 // loop_header_branch
      %33 = sbr.rel (%p31) target = $region8
    $region5: #{tpu_custom_call.1} parent=1 // loop_body
      %s35 = ssub.s32 %s30, 1
      %s36 = ssub.s32 %s30, 2
      %s37 = sadd.s32 %s30, 1
      %s38 = ssub.s32 %s30, %s37
      %p39 = scmp.eq.s32.totalorder %s38, 0
      %s41 = sadd.s32 %s40, 1
      %s42 = scalar_select %p39, %s40, %s41
      %p45 = pneg %p39
      %p46 = scmp.eq.s32.totalorder %s30, 1
      %p47 = por %p45, %p46
      %p48 = scmp.ne.s32.totalorder %s40, %s43
      %p49 = scmp.eq.s32.totalorder %s30, 0
      %p50 = por %p48, %p49
      %p51 = scmp.ne.s32.totalorder %s40, %s43
      %p52 = scmp.eq.s32.totalorder %s35, 1
      %p53 = por %p51, %p52
      %p54 = scmp.ne.s32.totalorder %s43, %s44
      %p55 = scmp.eq.s32.totalorder %s35, 0
      %p56 = por %p54, %p55
      %p57 = scmp.ne.s32.totalorder %s43, %s44
      %p58 = scmp.eq.s32.totalorder %s36, 1
      %p59 = por %p57, %p58
      %p61 = scmp.ne.s32.totalorder %s44, %s60
      %p62 = scmp.eq.s32.totalorder %s36, 0
      %p63 = por %p61, %p62
      %s64 = ssub.s32 %s30, %s37
      %p65 = scmp.eq.s32.totalorder %s64, 0
      %s67 = sadd.s32 %s66, 1
      %s68 = scalar_select %p65, %s66, %s67
      %p71 = pneg %p65
      %p72 = scmp.eq.s32.totalorder %s30, 1
      %p73 = por %p71, %p72
      %p74 = scmp.ne.s32.totalorder %s66, %s69
      %p75 = scmp.eq.s32.totalorder %s30, 0
      %p76 = por %p74, %p75
      %p77 = scmp.ne.s32.totalorder %s66, %s69
      %p78 = scmp.eq.s32.totalorder %s35, 1
      %p79 = por %p77, %p78
      %p80 = scmp.ne.s32.totalorder %s69, %s70
      %p81 = scmp.eq.s32.totalorder %s35, 0
      %p82 = por %p80, %p81
      %p83 = scmp.ne.s32.totalorder %s69, %s70
      %p84 = scmp.eq.s32.totalorder %s36, 1
      %p85 = por %p83, %p84
      %p87 = scmp.ne.s32.totalorder %s70, %s86
      %p88 = scmp.eq.s32.totalorder %s36, 0
      %p89 = por %p87, %p88
      %s90 = ssub.s32 %s30, %s37
      %p91 = scmp.eq.s32.totalorder %s90, 0
      %s93 = sadd.s32 %s92, 1
      %s94 = scalar_select %p91, %s92, %s93
      %p97 = pneg %p91
      %p98 = scmp.eq.s32.totalorder %s30, 1
      %p99 = por %p97, %p98
      %p100 = scmp.ne.s32.totalorder %s92, %s95
      %p101 = scmp.eq.s32.totalorder %s30, 0
      %p102 = por %p100, %p101
      %p103 = scmp.ne.s32.totalorder %s92, %s95
      %p104 = scmp.eq.s32.totalorder %s35, 1
      %p105 = por %p103, %p104
      %p106 = scmp.ne.s32.totalorder %s95, %s96
      %p107 = scmp.eq.s32.totalorder %s35, 0
      %p108 = por %p106, %p107
      %p109 = scmp.ne.s32.totalorder %s95, %s96
      %p110 = scmp.eq.s32.totalorder %s36, 1
      %p111 = por %p109, %p110
      %p113 = scmp.ne.s32.totalorder %s96, %s112
      %p114 = scmp.eq.s32.totalorder %s36, 0
      %p115 = por %p113, %p114
      %s116 = ssub.s32 %s30, %s37
      %p117 = scmp.eq.s32.totalorder %s116, 0
      %s119 = sadd.s32 %s118, 1
      %s120 = scalar_select %p117, %s118, %s119
      %p123 = pneg %p117
      %p124 = scmp.eq.s32.totalorder %s30, 1
      %p125 = por %p123, %p124
      %p126 = scmp.ne.s32.totalorder %s118, %s121
      %p127 = scmp.eq.s32.totalorder %s30, 0
      %p128 = por %p126, %p127
      %p129 = scmp.ne.s32.totalorder %s118, %s121
      %p130 = scmp.eq.s32.totalorder %s35, 1
      %p131 = por %p129, %p130
      %p132 = scmp.ne.s32.totalorder %s121, %s122
      %p133 = scmp.eq.s32.totalorder %s35, 0
      %p134 = por %p132, %p133
      %p135 = scmp.ne.s32.totalorder %s121, %s122
      %p136 = scmp.eq.s32.totalorder %s36, 1
      %p137 = por %p135, %p136
      %p139 = scmp.ne.s32.totalorder %s122, %s138
      %p140 = scmp.eq.s32.totalorder %s36, 0
      %p141 = por %p139, %p140
      %s143 = sadd.s32 %s142, 1
      %p146 = scmp.eq.s32.totalorder %s30, 1
      %p147 = scmp.ne.s32.totalorder %s142, %s144
      %p148 = scmp.eq.s32.totalorder %s30, 0
      %p149 = por %p147, %p148
      %p150 = scmp.ne.s32.totalorder %s142, %s144
      %p151 = scmp.eq.s32.totalorder %s35, 1
      %p152 = por %p150, %p151
      %p153 = scmp.ne.s32.totalorder %s144, %s145
      %p154 = scmp.eq.s32.totalorder %s35, 0
      %p155 = por %p153, %p154
      %p156 = scmp.ne.s32.totalorder %s144, %s145
      %p157 = scmp.eq.s32.totalorder %s36, 1
      %p158 = por %p156, %p157
      %p160 = scmp.ne.s32.totalorder %s145, %s159
      %p161 = scmp.eq.s32.totalorder %s36, 0
      %p162 = por %p160, %p161
      %s164 = sadd.s32 %s163, 1
      %p167 = scmp.eq.s32.totalorder %s30, 1
      %p168 = scmp.ne.s32.totalorder %s163, %s165
      %p169 = scmp.eq.s32.totalorder %s30, 0
      %p170 = por %p168, %p169
      %p171 = scmp.ne.s32.totalorder %s163, %s165
      %p172 = scmp.eq.s32.totalorder %s35, 1
      %p173 = por %p171, %p172
      %p174 = scmp.ne.s32.totalorder %s165, %s166
      %p175 = scmp.eq.s32.totalorder %s35, 0
      %p176 = por %p174, %p175
      %p177 = scmp.ne.s32.totalorder %s165, %s166
      %p178 = scmp.eq.s32.totalorder %s36, 1
      %p179 = por %p177, %p178
      %p181 = scmp.ne.s32.totalorder %s166, %s180
      %p182 = scmp.eq.s32.totalorder %s36, 0
      %p183 = por %p181, %p182
      %s185 = sadd.s32 %s184, 1
      %p188 = scmp.eq.s32.totalorder %s30, 1
      %p189 = scmp.ne.s32.totalorder %s184, %s186
      %p190 = scmp.eq.s32.totalorder %s30, 0
      %p191 = por %p189, %p190
      %p192 = scmp.ne.s32.totalorder %s184, %s186
      %p193 = scmp.eq.s32.totalorder %s35, 1
      %p194 = por %p192, %p193
      %p195 = scmp.ne.s32.totalorder %s186, %s187
      %p196 = scmp.eq.s32.totalorder %s35, 0
      %p197 = por %p195, %p196
      %p198 = scmp.ne.s32.totalorder %s186, %s187
      %p199 = scmp.eq.s32.totalorder %s36, 1
      %p200 = por %p198, %p199
      %p202 = scmp.ne.s32.totalorder %s187, %s201
      %p203 = scmp.eq.s32.totalorder %s36, 0
      %p204 = por %p202, %p203
      %s206 = sadd.s32 %s205, 1
      %p209 = scmp.eq.s32.totalorder %s30, 1
      %p210 = scmp.ne.s32.totalorder %s205, %s207
      %p211 = scmp.eq.s32.totalorder %s30, 0
      %p212 = por %p210, %p211
      %p213 = scmp.ne.s32.totalorder %s205, %s207
      %p214 = scmp.eq.s32.totalorder %s35, 1
      %p215 = por %p213, %p214
      %p216 = scmp.ne.s32.totalorder %s207, %s208
      %p217 = scmp.eq.s32.totalorder %s35, 0
      %p218 = por %p216, %p217
      %p219 = scmp.ne.s32.totalorder %s207, %s208
      %p220 = scmp.eq.s32.totalorder %s36, 1
      %p221 = por %p219, %p220
      %p223 = scmp.ne.s32.totalorder %s208, %s222
      %p224 = scmp.eq.s32.totalorder %s36, 0
      %p225 = por %p223, %p224
      %s227 = sadd.s32 %s226, 1
      %p230 = scmp.eq.s32.totalorder %s30, 1
      %p231 = scmp.ne.s32.totalorder %s226, %s228
      %p232 = scmp.eq.s32.totalorder %s30, 0
      %p233 = por %p231, %p232
      %p234 = scmp.ne.s32.totalorder %s226, %s228
      %p235 = scmp.eq.s32.totalorder %s35, 1
      %p236 = por %p234, %p235
      %p237 = scmp.ne.s32.totalorder %s228, %s229
      %p238 = scmp.eq.s32.totalorder %s35, 0
      %p239 = por %p237, %p238
      %p240 = scmp.ne.s32.totalorder %s228, %s229
      %p241 = scmp.eq.s32.totalorder %s36, 1
      %p242 = por %p240, %p241
      %p244 = scmp.ne.s32.totalorder %s229, %s243
      %p245 = scmp.eq.s32.totalorder %s36, 0
      %p246 = por %p244, %p245
      %s247 = ssub.s32 %s30, %s37
      %p248 = scmp.eq.s32.totalorder %s247, 0
      %s250 = sadd.s32 %s249, 1
      %s251 = scalar_select %p248, %s249, %s250
      %p254 = pneg %p248
      %p255 = scmp.eq.s32.totalorder %s30, 1
      %p256 = por %p254, %p255
      %p257 = scmp.ne.s32.totalorder %s249, %s252
      %p258 = scmp.eq.s32.totalorder %s30, 0
      %p259 = por %p257, %p258
      %p260 = scmp.ne.s32.totalorder %s249, %s252
      %p261 = scmp.eq.s32.totalorder %s35, 1
      %p262 = por %p260, %p261
      %p263 = scmp.ne.s32.totalorder %s252, %s253
      %p264 = scmp.eq.s32.totalorder %s35, 0
      %p265 = por %p263, %p264
      %p266 = scmp.ne.s32.totalorder %s252, %s253
      %p267 = scmp.eq.s32.totalorder %s36, 1
      %p268 = por %p266, %p267
      %p270 = scmp.ne.s32.totalorder %s253, %s269
      %p271 = scmp.eq.s32.totalorder %s36, 0
      %p272 = por %p270, %p271
      %s273 = ssub.s32 %s30, %s37
      %p274 = scmp.eq.s32.totalorder %s273, 0
      %s276 = sadd.s32 %s275, 1
      %s277 = scalar_select %p274, %s275, %s276
      %p280 = pneg %p274
      %p281 = scmp.eq.s32.totalorder %s30, 1
      %p282 = por %p280, %p281
      %p283 = scmp.ne.s32.totalorder %s275, %s278
      %p284 = scmp.eq.s32.totalorder %s30, 0
      %p285 = por %p283, %p284
      %p286 = scmp.ne.s32.totalorder %s275, %s278
      %p287 = scmp.eq.s32.totalorder %s35, 1
      %p288 = por %p286, %p287
      %p289 = scmp.ne.s32.totalorder %s278, %s279
      %p290 = scmp.eq.s32.totalorder %s35, 0
      %p291 = por %p289, %p290
      %p292 = scmp.ne.s32.totalorder %s278, %s279
      %p293 = scmp.eq.s32.totalorder %s36, 1
      %p294 = por %p292, %p293
      %p296 = scmp.ne.s32.totalorder %s279, %s295
      %p297 = scmp.eq.s32.totalorder %s36, 0
      %p298 = por %p296, %p297
      %p299 = scmp.le.s32.totalorder 1, %s30
      %p300 = scmp.lt.s32.totalorder %s30, 3
      %p301 = pnand %p299, %p300
      %p302 = pneg %p301
      // Predicated region
      $region9: #{tpu_custom_call.1} parent=5 // pred_check
        _
      $region10: #{tpu_custom_call.1} parent=5 // pred_check_branch
        %304 = sbr.rel (%p301) target = $region12
      $region11: #{tpu_custom_call.1} parent=5 // pred_region
        %s305 = ssub.s32 %s30, 1
        // Predicated region
        $region13: #{tpu_custom_call.1} parent=11 // pred_check
          %p306 = pneg %p155
        $region14: #{tpu_custom_call.1} parent=11 // pred_check_branch
          %308 = sbr.rel (%p306) target = $region16
        $region15: #{tpu_custom_call.1} parent=11 // pred_region
          %s310 = ssub.s32 8192, 8192
          %311 = vsyncadd [#allocation7], %s310
          %s312 = sshll.u32 [#allocation8], 4
          %s313 = int_to_ptr.vmem [resolvable:$true] %s312
          %318 = dma.hbm_to_vmem [thread:$0]  %s4, 8192, %s313, [#allocation7], 128, 128, 8
        $region16: #{tpu_custom_call.1} parent=11 // pred_fallthru
          _
        // Predicated region
        $region17: #{tpu_custom_call.1} parent=11 // pred_check
          %p319 = pneg %p176
        $region18: #{tpu_custom_call.1} parent=11 // pred_check_branch
          %321 = sbr.rel (%p319) target = $region20
        $region19: #{tpu_custom_call.1} parent=11 // pred_region
          _
        $region20: #{tpu_custom_call.1} parent=11 // pred_fallthru
          _
        // Predicated region
        $region21: #{tpu_custom_call.1} parent=11 // pred_check
          %p322 = pneg %p197
        $region22: #{tpu_custom_call.1} parent=11 // pred_check_branch
          %324 = sbr.rel (%p322) target = $region24
        $region23: #{tpu_custom_call.1} parent=11 // pred_region
          _
        $region24: #{tpu_custom_call.1} parent=11 // pred_fallthru
          _
        // Predicated region
        $region25: #{tpu_custom_call.1} parent=11 // pred_check
          %p325 = pneg %p218
        $region26: #{tpu_custom_call.1} parent=11 // pred_check_branch
          %327 = sbr.rel (%p325) target = $region28
        $region27: #{tpu_custom_call.1} parent=11 // pred_region
          %s329 = ssub.s32 4096, 4096
          %330 = vsyncadd [#allocation10], %s329
          %s331 = sshll.u32 [#allocation9], 4
          %s332 = int_to_ptr.vmem [resolvable:$true] %s331
          %337 = dma.hbm_to_vmem [thread:$0]  %s7, 4096, %s332, [#allocation10], 128, 128, 8
        $region28: #{tpu_custom_call.1} parent=11 // pred_fallthru
          _
        // Predicated region
        $region29: #{tpu_custom_call.1} parent=11 // pred_check
          %p338 = pneg %p239
        $region30: #{tpu_custom_call.1} parent=11 // pred_check_branch
          %340 = sbr.rel (%p338) target = $region32
        $region31: #{tpu_custom_call.1} parent=11 // pred_region
          _
        $region32: #{tpu_custom_call.1} parent=11 // pred_fallthru
          _
      $region12: #{tpu_custom_call.1} parent=5 // pred_fallthru
        _
      %p341 = scmp.lt.s32.totalorder %s30, 2
      // Predicated region
      $region33: #{tpu_custom_call.1} parent=5 // pred_check
        %p342 = pneg %p341
      $region34: #{tpu_custom_call.1} parent=5 // pred_check_branch
        %344 = sbr.rel (%p342) target = $region36
      $region35: #{tpu_custom_call.1} parent=5 // pred_region
        // Predicated region
        $region37: #{tpu_custom_call.1} parent=35 // pred_check
          %p345 = pneg %p50
        $region38: #{tpu_custom_call.1} parent=35 // pred_check_branch
          %347 = sbr.rel (%p345) target = $region40
        $region39: #{tpu_custom_call.1} parent=35 // pred_region
          %s348 = sand.u32 %s40, 1
          %s349 = scalar_lea.sflag [#allocation4], %s348
          %s350 = sand.u32 %s40, 1
          %s351 = smul.addr %s350, 32
          %s352 = scalar_lea.vmem [#allocation3], %s351
          %s353 = smul.u32 2, %s30
          %s355 = ssub.s32 512, 512
          %356 = vsyncadd %s349, %s355
          %s357 = smul.addr %s353, 2
          %s358 = smul.addr %s357, 128
          %s359 = scalar_lea.hbm %s0, %s358
          %s360 = sshll.u32 %s352, 4
          %s361 = int_to_ptr.vmem [resolvable:$true] %s360
          %366 = dma.hbm_to_vmem [thread:$0]  %s359, 512, %s361, %s349, 256, 256, 16
        $region40: #{tpu_custom_call.1} parent=35 // pred_fallthru
          _
        // Predicated region
        $region41: #{tpu_custom_call.1} parent=35 // pred_check
          %p367 = pneg %p76
        $region42: #{tpu_custom_call.1} parent=35 // pred_check_branch
          %369 = sbr.rel (%p367) target = $region44
        $region43: #{tpu_custom_call.1} parent=35 // pred_region
          %s370 = smul.u32 2, %s30
          %p371 = scmp.lt.s32.totalorder %s370, 3
          %s372 = scalar_select %p371, %s370, 3
          %s373 = smul.addr %s372, 2
          %s374 = smul.addr %s373, 4
          %s375 = scalar_lea.vmem %s1, %s374
          %s376 = smul.u32 2, %s30
        $region44: #{tpu_custom_call.1} parent=35 // pred_fallthru
          _
        // Predicated region
        $region45: #{tpu_custom_call.1} parent=35 // pred_check
          %p377 = pneg %p102
        $region46: #{tpu_custom_call.1} parent=35 // pred_check_branch
          %379 = sbr.rel (%p377) target = $region48
        $region47: #{tpu_custom_call.1} parent=35 // pred_region
          %s380 = sand.u32 %s30, 1
          %s381 = scalar_lea.sflag [#allocation7], %s380
          %s382 = sand.u32 %s92, 1
          %s383 = smul.addr %s382, 16
          %s384 = scalar_lea.vmem [#allocation6], %s383
          %s385 = smul.u32 2, %s30
          %s387 = ssub.s32 256, 256
          %388 = vsyncadd %s381, %s387
          %s389 = smul.addr %s385, 2
          %s390 = smul.addr %s389, 64
          %s391 = scalar_lea.hbm %s2, %s390
          %s392 = sshll.u32 %s384, 4
          %s393 = int_to_ptr.vmem [resolvable:$true] %s392
          %398 = dma.hbm_to_vmem [thread:$0]  %s391, 256, %s393, %s381, 128, 128, 8
        $region48: #{tpu_custom_call.1} parent=35 // pred_fallthru
          _
        // Predicated region
        $region49: #{tpu_custom_call.1} parent=35 // pred_check
          %p399 = pneg %p128
        $region50: #{tpu_custom_call.1} parent=35 // pred_check_branch
          %401 = sbr.rel (%p399) target = $region52
        $region51: #{tpu_custom_call.1} parent=35 // pred_region
          %s402 = smul.u32 2, %s30
          %p403 = scmp.lt.s32.totalorder %s402, 3
          %s404 = scalar_select %p403, %s402, 3
          %s405 = smul.addr %s404, 8
          %s406 = scalar_lea.vmem %s3, %s405
          %s407 = smul.u32 2, %s30
        $region52: #{tpu_custom_call.1} parent=35 // pred_fallthru
          _
      $region36: #{tpu_custom_call.1} parent=5 // pred_fallthru
        _
      %p408 = scmp.le.s32.totalorder 1, %s30
      %p409 = scmp.lt.s32.totalorder %s30, 3
      %p410 = pnand %p408, %p409
      %p411 = pneg %p410
      // Predicated region
      $region53: #{tpu_custom_call.1} parent=5 // pred_check
        _
      $region54: #{tpu_custom_call.1} parent=5 // pred_check_branch
        %413 = sbr.rel (%p410) target = $region56
      $region55: #{tpu_custom_call.1} parent=5 // pred_region
        %s414 = ssub.s32 %s30, 1
        %s415 = sand.u32 %s43, 1
        %s416 = scalar_lea.sflag [#allocation4], %s415
        %s417 = sand.u32 %s43, 1
        %s418 = smul.addr %s417, 32
        %s419 = scalar_lea.vmem [#allocation3], %s418
        // Predicated region
        $region57: #{tpu_custom_call.1} parent=55 // pred_check
          %p420 = pneg %p56
        $region58: #{tpu_custom_call.1} parent=55 // pred_check_branch
          %422 = sbr.rel (%p420) target = $region60
        $region59: #{tpu_custom_call.1} parent=55 // pred_region
          %423 = dma.done %s416, 512
        $region60: #{tpu_custom_call.1} parent=55 // pred_fallthru
          _
        %s424 = sand.u32 %s35, 1
        %s425 = scalar_lea.sflag [#allocation7], %s424
        %s426 = sand.u32 %s95, 1
        %s427 = smul.addr %s426, 16
        %s428 = scalar_lea.vmem [#allocation6], %s427
        // Predicated region
        $region61: #{tpu_custom_call.1} parent=55 // pred_check
          %p429 = pneg %p108
        $region62: #{tpu_custom_call.1} parent=55 // pred_check_branch
          %431 = sbr.rel (%p429) target = $region64
        $region63: #{tpu_custom_call.1} parent=55 // pred_region
          %432 = dma.done %s425, 256
        $region64: #{tpu_custom_call.1} parent=55 // pred_fallthru
          _
        // Predicated region
        $region65: #{tpu_custom_call.1} parent=55 // pred_check
          %p433 = pneg %p155
        $region66: #{tpu_custom_call.1} parent=55 // pred_check_branch
          %435 = sbr.rel (%p433) target = $region68
        $region67: #{tpu_custom_call.1} parent=55 // pred_region
          %436 = dma.done [#allocation7], 8192
        $region68: #{tpu_custom_call.1} parent=55 // pred_fallthru
          _
        // Predicated region
        $region69: #{tpu_custom_call.1} parent=55 // pred_check
          %p437 = pneg %p218
        $region70: #{tpu_custom_call.1} parent=55 // pred_check_branch
          %439 = sbr.rel (%p437) target = $region72
        $region71: #{tpu_custom_call.1} parent=55 // pred_region
          %440 = dma.done [#allocation10], 4096
        $region72: #{tpu_custom_call.1} parent=55 // pred_fallthru
          _
        %s441 = sand.u32 %s43, 1
        %s442 = scalar_lea.sflag [#allocation4], %s441
        %s443 = sand.u32 %s43, 1
        %s444 = smul.addr %s443, 32
        %s445 = scalar_lea.vmem [#allocation3], %s444
        %p446 = pneg %p56
        %p447 = pneg %p53
        %s448 = smul.u32 2, %s35
        %p449 = scmp.lt.s32.totalorder %s448, 3
        %s450 = scalar_select %p449, %s448, 3
        %s451 = smul.addr %s450, 2
        %s452 = smul.addr %s451, 4
        %s453 = scalar_lea.vmem %s1, %s452
        %p454 = pneg %p82
        %p455 = pneg %p79
        %s456 = sand.u32 %s35, 1
        %s457 = scalar_lea.sflag [#allocation7], %s456
        %s458 = sand.u32 %s95, 1
        %s459 = smul.addr %s458, 16
        %s460 = scalar_lea.vmem [#allocation6], %s459
        %p461 = pneg %p108
        %p462 = pneg %p105
        %s463 = smul.u32 2, %s35
        %p464 = scmp.lt.s32.totalorder %s463, 3
        %s465 = scalar_select %p464, %s463, 3
        %s466 = smul.addr %s465, 8
        %s467 = scalar_lea.vmem %s3, %s466
        %p468 = pneg %p134
        %p469 = pneg %p131
        %p470 = pneg %p155
        %p471 = pneg %p152
        %p472 = pneg %p176
        %p473 = pneg %p173
        %p474 = pneg %p197
        %p475 = pneg %p194
        %p476 = pneg %p218
        %p477 = pneg %p215
        %p478 = pneg %p239
        %p479 = pneg %p236
        %p480 = pneg %p265
        %p481 = pneg %p262
        %s482 = sand.u32 %s252, 1
        %s483 = scalar_lea.sflag [#allocation5], %s482
        %s484 = sand.u32 %s252, 1
        %s485 = smul.addr %s484, 32
        %s486 = scalar_lea.vmem [#allocation11], %s485
        %p487 = pneg %p291
        %p488 = pneg %p288
        %s489 = sand.u32 %s278, 1
        %s490 = scalar_lea.sflag [#allocation13], %s489
        %s491 = sand.u32 %s278, 1
        %s492 = smul.addr %s491, 16
        %s493 = scalar_lea.vmem [#allocation12], %s492
        %s494 = smul.u32 2, %s35
        %s495 = smul.u32 2, %s35
        %p496 = scmp.lt.s32.totalorder %s495, 3
        %s497 = scalar_select %p496, %s495, 3
        %s498 = smul.addr %s497, 2
        %s499 = smul.addr %s498, 4
        %s500 = scalar_lea.vmem %s1, %s499
        %s501 = smul.u32 2, %s35
        %s502 = smul.u32 2, %s35
        %s503 = smul.u32 2, %s35
        %p504 = scmp.lt.s32.totalorder %s503, 3
        %s505 = scalar_select %p504, %s503, 3
        %s506 = smul.addr %s505, 8
        %s507 = scalar_lea.vmem %s3, %s506
        %s508 = smul.u32 2, %s35
        %s509 = smul.u32 2, %s35
        %s510 = smul.u32 2, %s35
        %v511 = vld [vmem:[%s419] sm:$0xff]
        %v512 = vld [vmem:[%s419 + $0x8] sm:$0xff]
        %v513 = vld [vmem:[%s419 + $0x10] sm:$0xff]
        %v514 = vld [vmem:[%s419 + $0x18] sm:$0xff]
        %v515 = vld [vmem:[%s500] sm:$0xff]
        %v516 = vld [vmem:[%s500 + $0x8] sm:$0xff]
        %v517 = vunpack.c.l.bf16 %v515
        %v518 = vunpack.c.h.bf16 %v515
        %v519 = vunpack.c.l.bf16 %v516
        %v520 = vunpack.c.h.bf16 %v516
        %v521 = vld [vmem:[%s428] sm:$0xff]
        %v522 = vld [vmem:[%s428 + $0x8] sm:$0xff]
        %v523 = vunpack.c.l.bf16 %v521
        %v524 = vunpack.c.h.bf16 %v521
        %v525 = vunpack.c.l.bf16 %v522
        %v526 = vunpack.c.h.bf16 %v522
        %v527 = vld [vmem:[%s507] sm:$0xff]
        %v528 = vld [vmem:[%s507 + $0x8] sm:$0xff]
        %v529 = vsub.f32 1.0, %v517
        %v530 = vsub.f32 1.0, %v518
        %v531 = vsub.f32 1.0, %v519
        %v532 = vsub.f32 1.0, %v520
        %534 = vset.pattern.permute.xlu0 0
        %535 = vperm.xlu0 %534, %v527
        %v536 = vpop.permute.xlu0 %535
        %539 = vset.pattern.permute.xlu0 0
        %540 = vperm.xlu0 %539, %v528
        %v541 = vpop.permute.xlu0 %540
        %v543 = vmul.f32 %v523, %v536
        %v544 = vmul.f32 %v524, %v536
        %v545 = vmul.f32 %v525, %v541
        %v546 = vmul.f32 %v526, %v541
        %v547 = vmul.f32 %v529, %v543
        %v548 = vmul.f32 %v530, %v544
        %v549 = vmul.f32 %v531, %v545
        %v550 = vmul.f32 %v532, %v546
        %v551 = vadd.f32 %v511, %v547
        %v552 = vadd.f32 %v512, %v548
        %v553 = vadd.f32 %v513, %v549
        %v554 = vadd.f32 %v514, %v550
        %v555 = vmul.f32 %v517, %v511
        %v556 = vmul.f32 %v518, %v512
        %v557 = vmul.f32 %v519, %v513
        %v558 = vmul.f32 %v520, %v514
        %v559 = vmul.f32 %v527, %v527
        %v560 = vmul.f32 %v528, %v528
        %v561 = vadd.f32 %v559, 0.25
        %v562 = vadd.f32 %v560, 0.25
        %v563 = vrsqrt.pop %v561
        %v564 = vrsqrt.pop %v562
        %v565 = vmul.f32 %v527, 0.5
        %v566 = vmul.f32 %v528, 0.5
        %v567 = vmul.f32 %v565, %v563
        %v568 = vmul.f32 %v566, %v564
        %v569 = vrcp.pop %v561
        %v570 = vmul.f32 0.25, %v569
        %v571 = vrcp.pop %v562
        %v572 = vmul.f32 0.25, %v571
        %v573 = vlog2.pop %v527
        %v574 = vmul.f32 %v573, 0.6931472
        %v575 = vlog2.pop %v528
        %v576 = vmul.f32 %v575, 0.6931472
        %v577 = vmul.f32 %v574, 0.25
        %v578 = vmul.f32 %v576, 0.25
        %v579 = vmul.f32 %v529, %v551
        %v580 = vmul.f32 %v530, %v552
        %v581 = vmul.f32 %v531, %v553
        %v582 = vmul.f32 %v532, %v554
        %v583 = vadd.f32 %v555, %v579
        %v584 = vadd.f32 %v556, %v580
        %v585 = vadd.f32 %v557, %v581
        %v586 = vadd.f32 %v558, %v582
        %588 = vset.pattern.permute.xlu0 0
        %589 = vperm.xlu0 %588, %v563
        %v590 = vpop.permute.xlu0 %589
        %593 = vset.pattern.permute.xlu0 0
        %594 = vperm.xlu0 %593, %v564
        %v595 = vpop.permute.xlu0 %594
        %v597 = vmul.f32 %v590, %v583
        %v598 = vmul.f32 %v590, %v584
        %v599 = vmul.f32 %v595, %v585
        %v600 = vmul.f32 %v595, %v586
        %v601 = vpack.c.bf16 %v599, %v597
        %v602 = vpack.c.bf16 %v600, %v598
        %603 = vst [vmem:[#allocation2] sm:$0xff] %v601
        %604 = vst [vmem:[#allocation2 + $0x8] sm:$0xff] %v602
        %v607 = vunpack.c.l.b16 %v515
        %v608 = vunpack.c.h.b16 %v515
        %v609 = vunpack.c.l.b16 %v516
        %v610 = vunpack.c.h.b16 %v516
        %v611 = vpack.c.b16 %v609, %v607
        %v612 = vpack.c.b16 %v610, %v608
        %615 = vst [vmem:[#allocation2 + $0x10] sm:$0xff] %v611
        %616 = vst [vmem:[#allocation2 + $0x18] sm:$0xff] %v612
        %v617 = vld [vmem:[#allocation2] sm:$0xff]
        %v618 = vld [vmem:[#allocation2 + $0x8] sm:$0xff]
        %v619 = vld [vmem:[#allocation2 + $0x10] sm:$0xff]
        %v620 = vld [vmem:[#allocation2 + $0x18] sm:$0xff]
        %v621 = vld [vmem:[#allocation8] sm:$0xff]
        %v622 = vld [vmem:[#allocation8 + $0x8] sm:$0xff]
        %v623 = vld [vmem:[#allocation8 + $0x10] sm:$0xff]
        %v624 = vld [vmem:[#allocation8 + $0x18] sm:$0xff]
        %v625 = vld [vmem:[#allocation8 + $0x20] sm:$0xff]
        %v626 = vld [vmem:[#allocation8 + $0x28] sm:$0xff]
        %v627 = vld [vmem:[#allocation8 + $0x30] sm:$0xff]
        %v628 = vld [vmem:[#allocation8 + $0x38] sm:$0xff]
        %v629 = vld [vmem:[#allocation8 + $0x40] sm:$0xff]
        %v630 = vld [vmem:[#allocation8 + $0x48] sm:$0xff]
        %v631 = vld [vmem:[#allocation8 + $0x50] sm:$0xff]
        %v632 = vld [vmem:[#allocation8 + $0x58] sm:$0xff]
        %v633 = vld [vmem:[#allocation8 + $0x60] sm:$0xff]
        %v634 = vld [vmem:[#allocation8 + $0x68] sm:$0xff]
        %v635 = vld [vmem:[#allocation8 + $0x70] sm:$0xff]
        %v636 = vld [vmem:[#allocation8 + $0x78] sm:$0xff]
        %v637 = vld [vmem:[#allocation8 + $0x80] sm:$0xff]
        %v638 = vld [vmem:[#allocation8 + $0x88] sm:$0xff]
        %v639 = vld [vmem:[#allocation8 + $0x90] sm:$0xff]
        %v640 = vld [vmem:[#allocation8 + $0x98] sm:$0xff]
        %v641 = vld [vmem:[#allocation8 + $0xa0] sm:$0xff]
        %v642 = vld [vmem:[#allocation8 + $0xa8] sm:$0xff]
        %v643 = vld [vmem:[#allocation8 + $0xb0] sm:$0xff]
        %v644 = vld [vmem:[#allocation8 + $0xb8] sm:$0xff]
        %v645 = vld [vmem:[#allocation8 + $0xc0] sm:$0xff]
        %v646 = vld [vmem:[#allocation8 + $0xc8] sm:$0xff]
        %v647 = vld [vmem:[#allocation8 + $0xd0] sm:$0xff]
        %v648 = vld [vmem:[#allocation8 + $0xd8] sm:$0xff]
        %v649 = vld [vmem:[#allocation8 + $0xe0] sm:$0xff]
        %v650 = vld [vmem:[#allocation8 + $0xe8] sm:$0xff]
        %v651 = vld [vmem:[#allocation8 + $0xf0] sm:$0xff]
        %v652 = vld [vmem:[#allocation8 + $0xf8] sm:$0xff]
        %v653 = vld [vmem:[#allocation8 + $0x100] sm:$0xff]
        %v654 = vld [vmem:[#allocation8 + $0x108] sm:$0xff]
        %v655 = vld [vmem:[#allocation8 + $0x110] sm:$0xff]
        %v656 = vld [vmem:[#allocation8 + $0x118] sm:$0xff]
        %v657 = vld [vmem:[#allocation8 + $0x120] sm:$0xff]
        %v658 = vld [vmem:[#allocation8 + $0x128] sm:$0xff]
        %v659 = vld [vmem:[#allocation8 + $0x130] sm:$0xff]
        %v660 = vld [vmem:[#allocation8 + $0x138] sm:$0xff]
        %v661 = vld [vmem:[#allocation8 + $0x140] sm:$0xff]
        %v662 = vld [vmem:[#allocation8 + $0x148] sm:$0xff]
        %v663 = vld [vmem:[#allocation8 + $0x150] sm:$0xff]
        %v664 = vld [vmem:[#allocation8 + $0x158] sm:$0xff]
        %v665 = vld [vmem:[#allocation8 + $0x160] sm:$0xff]
        %v666 = vld [vmem:[#allocation8 + $0x168] sm:$0xff]
        %v667 = vld [vmem:[#allocation8 + $0x170] sm:$0xff]
        %v668 = vld [vmem:[#allocation8 + $0x178] sm:$0xff]
        %v669 = vld [vmem:[#allocation8 + $0x180] sm:$0xff]
        %v670 = vld [vmem:[#allocation8 + $0x188] sm:$0xff]
        %v671 = vld [vmem:[#allocation8 + $0x190] sm:$0xff]
        %v672 = vld [vmem:[#allocation8 + $0x198] sm:$0xff]
        %v673 = vld [vmem:[#allocation8 + $0x1a0] sm:$0xff]
        %v674 = vld [vmem:[#allocation8 + $0x1a8] sm:$0xff]
        %v675 = vld [vmem:[#allocation8 + $0x1b0] sm:$0xff]
        %v676 = vld [vmem:[#allocation8 + $0x1b8] sm:$0xff]
        %v677 = vld [vmem:[#allocation8 + $0x1c0] sm:$0xff]
        %v678 = vld [vmem:[#allocation8 + $0x1c8] sm:$0xff]
        %v679 = vld [vmem:[#allocation8 + $0x1d0] sm:$0xff]
        %v680 = vld [vmem:[#allocation8 + $0x1d8] sm:$0xff]
        %v681 = vld [vmem:[#allocation8 + $0x1e0] sm:$0xff]
        %v682 = vld [vmem:[#allocation8 + $0x1e8] sm:$0xff]
        %v683 = vld [vmem:[#allocation8 + $0x1f0] sm:$0xff]
        %v684 = vld [vmem:[#allocation8 + $0x1f8] sm:$0xff]
        %v685 = vld [vmem:[%s5] sm:$0x3]
        %687 = vset.pattern.permute.xlu0 0
        %688 = vperm.xlu0 %687, %v577
        %v689 = vpop.permute.xlu0 %688
        %692 = vset.pattern.permute.xlu0 0
        %693 = vperm.xlu0 %692, %v578
        %v694 = vpop.permute.xlu0 %693
        %v697 = vlaneseq
        %v698 = vshrl.u32 %v697, 7
        %v699 = vsub.s32 0, %v698
        %v700 = vrot.slane %v685, %v699
        %v701 = vlaneseq
        %v702 = vshrl.u32 %v701, 7
        %v703 = vsub.s32 1, %v702
        %v704 = vrot.slane %v685, %v703
        %v707 = vmul.f32 %v689, %v700
        %v708 = vmul.f32 %v689, %v704
        %v709 = vmul.f32 %v694, %v700
        %v710 = vmul.f32 %v694, %v704
        %v775 = vunpack.c.l.b16 %v621
        %v776 = vunpack.c.h.b16 %v621
        %v777 = vunpack.c.l.b16 %v622
        %v778 = vunpack.c.h.b16 %v622
        %v779 = vunpack.c.l.b16 %v623
        %v780 = vunpack.c.h.b16 %v623
        %v781 = vunpack.c.l.b16 %v624
        %v782 = vunpack.c.h.b16 %v624
        %v783 = vunpack.c.l.b16 %v625
        %v784 = vunpack.c.h.b16 %v625
        %v785 = vunpack.c.l.b16 %v626
        %v786 = vunpack.c.h.b16 %v626
        %v787 = vunpack.c.l.b16 %v627
        %v788 = vunpack.c.h.b16 %v627
        %v789 = vunpack.c.l.b16 %v628
        %v790 = vunpack.c.h.b16 %v628
        %v791 = vunpack.c.l.b16 %v629
        %v792 = vunpack.c.h.b16 %v629
        %v793 = vunpack.c.l.b16 %v630
        %v794 = vunpack.c.h.b16 %v630
        %v795 = vunpack.c.l.b16 %v631
        %v796 = vunpack.c.h.b16 %v631
        %v797 = vunpack.c.l.b16 %v632
        %v798 = vunpack.c.h.b16 %v632
        %v799 = vunpack.c.l.b16 %v633
        %v800 = vunpack.c.h.b16 %v633
        %v801 = vunpack.c.l.b16 %v634
        %v802 = vunpack.c.h.b16 %v634
        %v803 = vunpack.c.l.b16 %v635
        %v804 = vunpack.c.h.b16 %v635
        %v805 = vunpack.c.l.b16 %v636
        %v806 = vunpack.c.h.b16 %v636
        %v807 = vunpack.c.l.b16 %v637
        %v808 = vunpack.c.h.b16 %v637
        %v809 = vunpack.c.l.b16 %v638
        %v810 = vunpack.c.h.b16 %v638
        %v811 = vunpack.c.l.b16 %v639
        %v812 = vunpack.c.h.b16 %v639
        %v813 = vunpack.c.l.b16 %v640
        %v814 = vunpack.c.h.b16 %v640
        %v815 = vunpack.c.l.b16 %v641
        %v816 = vunpack.c.h.b16 %v641
        %v817 = vunpack.c.l.b16 %v642
        %v818 = vunpack.c.h.b16 %v642
        %v819 = vunpack.c.l.b16 %v643
        %v820 = vunpack.c.h.b16 %v643
        %v821 = vunpack.c.l.b16 %v644
        %v822 = vunpack.c.h.b16 %v644
        %v823 = vunpack.c.l.b16 %v645
        %v824 = vunpack.c.h.b16 %v645
        %v825 = vunpack.c.l.b16 %v646
        %v826 = vunpack.c.h.b16 %v646
        %v827 = vunpack.c.l.b16 %v647
        %v828 = vunpack.c.h.b16 %v647
        %v829 = vunpack.c.l.b16 %v648
        %v830 = vunpack.c.h.b16 %v648
        %v831 = vunpack.c.l.b16 %v649
        %v832 = vunpack.c.h.b16 %v649
        %v833 = vunpack.c.l.b16 %v650
        %v834 = vunpack.c.h.b16 %v650
        %v835 = vunpack.c.l.b16 %v651
        %v836 = vunpack.c.h.b16 %v651
        %v837 = vunpack.c.l.b16 %v652
        %v838 = vunpack.c.h.b16 %v652
        %v839 = vunpack.c.l.b16 %v653
        %v840 = vunpack.c.h.b16 %v653
        %v841 = vunpack.c.l.b16 %v654
        %v842 = vunpack.c.h.b16 %v654
        %v843 = vunpack.c.l.b16 %v655
        %v844 = vunpack.c.h.b16 %v655
        %v845 = vunpack.c.l.b16 %v656
        %v846 = vunpack.c.h.b16 %v656
        %v847 = vunpack.c.l.b16 %v657
        %v848 = vunpack.c.h.b16 %v657
        %v849 = vunpack.c.l.b16 %v658
        %v850 = vunpack.c.h.b16 %v658
        %v851 = vunpack.c.l.b16 %v659
        %v852 = vunpack.c.h.b16 %v659
        %v853 = vunpack.c.l.b16 %v660
        %v854 = vunpack.c.h.b16 %v660
        %v855 = vunpack.c.l.b16 %v661
        %v856 = vunpack.c.h.b16 %v661
        %v857 = vunpack.c.l.b16 %v662
        %v858 = vunpack.c.h.b16 %v662
        %v859 = vunpack.c.l.b16 %v663
        %v860 = vunpack.c.h.b16 %v663
        %v861 = vunpack.c.l.b16 %v664
        %v862 = vunpack.c.h.b16 %v664
        %v863 = vunpack.c.l.b16 %v665
        %v864 = vunpack.c.h.b16 %v665
        %v865 = vunpack.c.l.b16 %v666
        %v866 = vunpack.c.h.b16 %v666
        %v867 = vunpack.c.l.b16 %v667
        %v868 = vunpack.c.h.b16 %v667
        %v869 = vunpack.c.l.b16 %v668
        %v870 = vunpack.c.h.b16 %v668
        %v871 = vunpack.c.l.b16 %v669
        %v872 = vunpack.c.h.b16 %v669
        %v873 = vunpack.c.l.b16 %v670
        %v874 = vunpack.c.h.b16 %v670
        %v875 = vunpack.c.l.b16 %v671
        %v876 = vunpack.c.h.b16 %v671
        %v877 = vunpack.c.l.b16 %v672
        %v878 = vunpack.c.h.b16 %v672
        %v879 = vunpack.c.l.b16 %v673
        %v880 = vunpack.c.h.b16 %v673
        %v881 = vunpack.c.l.b16 %v674
        %v882 = vunpack.c.h.b16 %v674
        %v883 = vunpack.c.l.b16 %v675
        %v884 = vunpack.c.h.b16 %v675
        %v885 = vunpack.c.l.b16 %v676
        %v886 = vunpack.c.h.b16 %v676
        %v887 = vunpack.c.l.b16 %v677
        %v888 = vunpack.c.h.b16 %v677
        %v889 = vunpack.c.l.b16 %v678
        %v890 = vunpack.c.h.b16 %v678
        %v891 = vunpack.c.l.b16 %v679
        %v892 = vunpack.c.h.b16 %v679
        %v893 = vunpack.c.l.b16 %v680
        %v894 = vunpack.c.h.b16 %v680
        %v895 = vunpack.c.l.b16 %v681
        %v896 = vunpack.c.h.b16 %v681
        %v897 = vunpack.c.l.b16 %v682
        %v898 = vunpack.c.h.b16 %v682
        %v899 = vunpack.c.l.b16 %v683
        %v900 = vunpack.c.h.b16 %v683
        %v901 = vunpack.c.l.b16 %v684
        %v902 = vunpack.c.h.b16 %v684
        %v903 = vpack.c.b16 %v777, %v775
        %v904 = vpack.c.b16 %v778, %v776
        %v905 = vpack.c.b16 %v781, %v779
        %v906 = vpack.c.b16 %v782, %v780
        %v907 = vpack.c.b16 %v785, %v783
        %v908 = vpack.c.b16 %v786, %v784
        %v909 = vpack.c.b16 %v789, %v787
        %v910 = vpack.c.b16 %v790, %v788
        %v911 = vpack.c.b16 %v793, %v791
        %v912 = vpack.c.b16 %v794, %v792
        %v913 = vpack.c.b16 %v797, %v795
        %v914 = vpack.c.b16 %v798, %v796
        %v915 = vpack.c.b16 %v801, %v799
        %v916 = vpack.c.b16 %v802, %v800
        %v917 = vpack.c.b16 %v805, %v803
        %v918 = vpack.c.b16 %v806, %v804
        %v919 = vpack.c.b16 %v809, %v807
        %v920 = vpack.c.b16 %v810, %v808
        %v921 = vpack.c.b16 %v813, %v811
        %v922 = vpack.c.b16 %v814, %v812
        %v923 = vpack.c.b16 %v817, %v815
        %v924 = vpack.c.b16 %v818, %v816
        %v925 = vpack.c.b16 %v821, %v819
        %v926 = vpack.c.b16 %v822, %v820
        %v927 = vpack.c.b16 %v825, %v823
        %v928 = vpack.c.b16 %v826, %v824
        %v929 = vpack.c.b16 %v829, %v827
        %v930 = vpack.c.b16 %v830, %v828
        %v931 = vpack.c.b16 %v833, %v831
        %v932 = vpack.c.b16 %v834, %v832
        %v933 = vpack.c.b16 %v837, %v835
        %v934 = vpack.c.b16 %v838, %v836
        %v935 = vpack.c.b16 %v841, %v839
        %v936 = vpack.c.b16 %v842, %v840
        %v937 = vpack.c.b16 %v845, %v843
        %v938 = vpack.c.b16 %v846, %v844
        %v939 = vpack.c.b16 %v849, %v847
        %v940 = vpack.c.b16 %v850, %v848
        %v941 = vpack.c.b16 %v853, %v851
        %v942 = vpack.c.b16 %v854, %v852
        %v943 = vpack.c.b16 %v857, %v855
        %v944 = vpack.c.b16 %v858, %v856
        %v945 = vpack.c.b16 %v861, %v859
        %v946 = vpack.c.b16 %v862, %v860
        %v947 = vpack.c.b16 %v865, %v863
        %v948 = vpack.c.b16 %v866, %v864
        %v949 = vpack.c.b16 %v869, %v867
        %v950 = vpack.c.b16 %v870, %v868
        %v951 = vpack.c.b16 %v873, %v871
        %v952 = vpack.c.b16 %v874, %v872
        %v953 = vpack.c.b16 %v877, %v875
        %v954 = vpack.c.b16 %v878, %v876
        %v955 = vpack.c.b16 %v881, %v879
        %v956 = vpack.c.b16 %v882, %v880
        %v957 = vpack.c.b16 %v885, %v883
        %v958 = vpack.c.b16 %v886, %v884
        %v959 = vpack.c.b16 %v889, %v887
        %v960 = vpack.c.b16 %v890, %v888
        %v961 = vpack.c.b16 %v893, %v891
        %v962 = vpack.c.b16 %v894, %v892
        %v963 = vpack.c.b16 %v897, %v895
        %v964 = vpack.c.b16 %v898, %v896
        %v965 = vpack.c.b16 %v901, %v899
        %v966 = vpack.c.b16 %v902, %v900
        %1031 = vmatprep.subr.bf16.mxu0 %v904
        %1032 = vmatpush1.bf16.msra.mxu0 %v903
        %1033 = vmatprep.subr.bf16.mxu0 %v906
        %1034 = vmatpush1.bf16.msra.mxu0 %v905
        %1035 = vmatprep.subr.bf16.mxu0 %v908
        %1036 = vmatpush1.bf16.msra.mxu0 %v907
        %1037 = vmatprep.subr.bf16.mxu0 %v910
        %1038 = vmatpush1.bf16.msra.mxu0 %v909
        %1039 = vmatprep.subr.bf16.mxu0 %v912
        %1040 = vmatpush1.bf16.msra.mxu0 %v911
        %1041 = vmatprep.subr.bf16.mxu0 %v914
        %1042 = vmatpush1.bf16.msra.mxu0 %v913
        %1043 = vmatprep.subr.bf16.mxu0 %v916
        %1044 = vmatpush1.bf16.msra.mxu0 %v915
        %1045 = vmatprep.subr.bf16.mxu0 %v918
        %1046 = vmatpush1.bf16.msra.mxu0 %v917
        %1047 = vmatprep.subr.bf16.mxu0 %v920
        %1048 = vmatpush1.bf16.msra.mxu0 %v919
        %1049 = vmatprep.subr.bf16.mxu0 %v922
        %1050 = vmatpush1.bf16.msra.mxu0 %v921
        %1051 = vmatprep.subr.bf16.mxu0 %v924
        %1052 = vmatpush1.bf16.msra.mxu0 %v923
        %1053 = vmatprep.subr.bf16.mxu0 %v926
        %1054 = vmatpush1.bf16.msra.mxu0 %v925
        %1055 = vmatprep.subr.bf16.mxu0 %v928
        %1056 = vmatpush1.bf16.msra.mxu0 %v927
        %1057 = vmatprep.subr.bf16.mxu0 %v930
        %1058 = vmatpush1.bf16.msra.mxu0 %v929
        %1059 = vmatprep.subr.bf16.mxu0 %v932
        %1060 = vmatpush1.bf16.msra.mxu0 %v931
        %1061 = vmatprep.subr.bf16.mxu0 %v934
        %1062 = vmatpush1.bf16.msra.mxu0 %v933
        %1063 = vmatprep.mubr.bf16.mxu0 %v618
        %1064 = vmatmul.mubr.bf16.gmra.mrb[0].mxu0 %v617
        %v1065 = vpop.f32.mrb[0].mxu0
        %v1066 = vadd.f32 %v707, %v1065
        %v1067 = vpop.f32.mrb[0].mxu0
        %v1068 = vadd.f32 %v708, %v1067
        %v1069 = vpop.f32.mrb[0].mxu0
        %v1070 = vadd.f32 %v709, %v1069
        %v1071 = vpop.f32.mrb[0].mxu0
        %v1072 = vadd.f32 %v710, %v1071
        %1073 = vdwg.mxu0
        %1074 = vmatprep.subr.bf16.mxu0 %v936
        %1075 = vmatpush1.bf16.msra.mxu0 %v935
        %1076 = vmatprep.subr.bf16.mxu0 %v938
        %1077 = vmatpush1.bf16.msra.mxu0 %v937
        %1078 = vmatprep.subr.bf16.mxu0 %v940
        %1079 = vmatpush1.bf16.msra.mxu0 %v939
        %1080 = vmatprep.subr.bf16.mxu0 %v942
        %1081 = vmatpush1.bf16.msra.mxu0 %v941
        %1082 = vmatprep.subr.bf16.mxu0 %v944
        %1083 = vmatpush1.bf16.msra.mxu0 %v943
        %1084 = vmatprep.subr.bf16.mxu0 %v946
        %1085 = vmatpush1.bf16.msra.mxu0 %v945
        %1086 = vmatprep.subr.bf16.mxu0 %v948
        %1087 = vmatpush1.bf16.msra.mxu0 %v947
        %1088 = vmatprep.subr.bf16.mxu0 %v950
        %1089 = vmatpush1.bf16.msra.mxu0 %v949
        %1090 = vmatprep.subr.bf16.mxu0 %v952
        %1091 = vmatpush1.bf16.msra.mxu0 %v951
        %1092 = vmatprep.subr.bf16.mxu0 %v954
        %1093 = vmatpush1.bf16.msra.mxu0 %v953
        %1094 = vmatprep.subr.bf16.mxu0 %v956
        %1095 = vmatpush1.bf16.msra.mxu0 %v955
        %1096 = vmatprep.subr.bf16.mxu0 %v958
        %1097 = vmatpush1.bf16.msra.mxu0 %v957
        %1098 = vmatprep.subr.bf16.mxu0 %v960
        %1099 = vmatpush1.bf16.msra.mxu0 %v959
        %1100 = vmatprep.subr.bf16.mxu0 %v962
        %1101 = vmatpush1.bf16.msra.mxu0 %v961
        %1102 = vmatprep.subr.bf16.mxu0 %v964
        %1103 = vmatpush1.bf16.msra.mxu0 %v963
        %1104 = vmatprep.subr.bf16.mxu0 %v966
        %1105 = vmatpush1.bf16.msra.mxu0 %v965
        %1106 = vmatprep.mubr.bf16.mxu0 %v620
        %1107 = vmatmul.mubr.bf16.gmra.mrb[0].mxu0 %v619
        %v1108 = vpop.f32.mrb[0].mxu0
        %v1109 = vadd.f32 %v1066, %v1108
        %v1110 = vpop.f32.mrb[0].mxu0
        %v1111 = vadd.f32 %v1068, %v1110
        %v1112 = vpop.f32.mrb[0].mxu0
        %v1113 = vadd.f32 %v1070, %v1112
        %v1114 = vpop.f32.mrb[0].mxu0
        %v1115 = vadd.f32 %v1072, %v1114
        %1116 = vdwg.mxu0
        %v1117 = vld [vmem:[%s6] sm:$0x3]
        %v1119 = vlaneseq
        %v1120 = vshrl.u32 %v1119, 7
        %v1121 = vsub.s32 0, %v1120
        %v1122 = vrot.slane %v1117, %v1121
        %v1123 = vlaneseq
        %v1124 = vshrl.u32 %v1123, 7
        %v1125 = vsub.s32 1, %v1124
        %v1126 = vrot.slane %v1117, %v1125
        %v1129 = vadd.f32 %v1109, %v1122
        %v1130 = vadd.f32 %v1111, %v1126
        %v1131 = vadd.f32 %v1113, %v1122
        %v1132 = vadd.f32 %v1115, %v1126
        %v1133 = vtanh.pop %v1129
        %v1134 = vtanh.pop %v1130
        %v1135 = vtanh.pop %v1131
        %v1136 = vtanh.pop %v1132
        %v1137 = vpack.c.bf16 %v1135, %v1133
        %v1138 = vpack.c.bf16 %v1136, %v1134
        %v1139 = vld [vmem:[#allocation9] sm:$0xff]
        %v1140 = vld [vmem:[#allocation9 + $0x8] sm:$0xff]
        %v1141 = vld [vmem:[#allocation9 + $0x10] sm:$0xff]
        %v1142 = vld [vmem:[#allocation9 + $0x18] sm:$0xff]
        %v1143 = vld [vmem:[#allocation9 + $0x20] sm:$0xff]
        %v1144 = vld [vmem:[#allocation9 + $0x28] sm:$0xff]
        %v1145 = vld [vmem:[#allocation9 + $0x30] sm:$0xff]
        %v1146 = vld [vmem:[#allocation9 + $0x38] sm:$0xff]
        %v1147 = vld [vmem:[#allocation9 + $0x40] sm:$0xff]
        %v1148 = vld [vmem:[#allocation9 + $0x48] sm:$0xff]
        %v1149 = vld [vmem:[#allocation9 + $0x50] sm:$0xff]
        %v1150 = vld [vmem:[#allocation9 + $0x58] sm:$0xff]
        %v1151 = vld [vmem:[#allocation9 + $0x60] sm:$0xff]
        %v1152 = vld [vmem:[#allocation9 + $0x68] sm:$0xff]
        %v1153 = vld [vmem:[#allocation9 + $0x70] sm:$0xff]
        %v1154 = vld [vmem:[#allocation9 + $0x78] sm:$0xff]
        %v1155 = vld [vmem:[#allocation9 + $0x80] sm:$0xff]
        %v1156 = vld [vmem:[#allocation9 + $0x88] sm:$0xff]
        %v1157 = vld [vmem:[#allocation9 + $0x90] sm:$0xff]
        %v1158 = vld [vmem:[#allocation9 + $0x98] sm:$0xff]
        %v1159 = vld [vmem:[#allocation9 + $0xa0] sm:$0xff]
        %v1160 = vld [vmem:[#allocation9 + $0xa8] sm:$0xff]
        %v1161 = vld [vmem:[#allocation9 + $0xb0] sm:$0xff]
        %v1162 = vld [vmem:[#allocation9 + $0xb8] sm:$0xff]
        %v1163 = vld [vmem:[#allocation9 + $0xc0] sm:$0xff]
        %v1164 = vld [vmem:[#allocation9 + $0xc8] sm:$0xff]
        %v1165 = vld [vmem:[#allocation9 + $0xd0] sm:$0xff]
        %v1166 = vld [vmem:[#allocation9 + $0xd8] sm:$0xff]
        %v1167 = vld [vmem:[#allocation9 + $0xe0] sm:$0xff]
        %v1168 = vld [vmem:[#allocation9 + $0xe8] sm:$0xff]
        %v1169 = vld [vmem:[#allocation9 + $0xf0] sm:$0xff]
        %v1170 = vld [vmem:[#allocation9 + $0xf8] sm:$0xff]
        %v1171 = vld [vmem:[%s8] sm:$0x3]
        %v1173 = vlaneseq
        %v1174 = vshrl.u32 %v1173, 7
        %v1175 = vsub.s32 0, %v1174
        %v1176 = vrot.slane %v1171, %v1175
        %v1177 = vlaneseq
        %v1178 = vshrl.u32 %v1177, 7
        %v1179 = vsub.s32 1, %v1178
        %v1180 = vrot.slane %v1171, %v1179
        %v1215 = vunpack.c.l.b16 %v1139
        %v1216 = vunpack.c.h.b16 %v1139
        %v1217 = vunpack.c.l.b16 %v1140
        %v1218 = vunpack.c.h.b16 %v1140
        %v1219 = vunpack.c.l.b16 %v1141
        %v1220 = vunpack.c.h.b16 %v1141
        %v1221 = vunpack.c.l.b16 %v1142
        %v1222 = vunpack.c.h.b16 %v1142
        %v1223 = vunpack.c.l.b16 %v1143
        %v1224 = vunpack.c.h.b16 %v1143
        %v1225 = vunpack.c.l.b16 %v1144
        %v1226 = vunpack.c.h.b16 %v1144
        %v1227 = vunpack.c.l.b16 %v1145
        %v1228 = vunpack.c.h.b16 %v1145
        %v1229 = vunpack.c.l.b16 %v1146
        %v1230 = vunpack.c.h.b16 %v1146
        %v1231 = vunpack.c.l.b16 %v1147
        %v1232 = vunpack.c.h.b16 %v1147
        %v1233 = vunpack.c.l.b16 %v1148
        %v1234 = vunpack.c.h.b16 %v1148
        %v1235 = vunpack.c.l.b16 %v1149
        %v1236 = vunpack.c.h.b16 %v1149
        %v1237 = vunpack.c.l.b16 %v1150
        %v1238 = vunpack.c.h.b16 %v1150
        %v1239 = vunpack.c.l.b16 %v1151
        %v1240 = vunpack.c.h.b16 %v1151
        %v1241 = vunpack.c.l.b16 %v1152
        %v1242 = vunpack.c.h.b16 %v1152
        %v1243 = vunpack.c.l.b16 %v1153
        %v1244 = vunpack.c.h.b16 %v1153
        %v1245 = vunpack.c.l.b16 %v1154
        %v1246 = vunpack.c.h.b16 %v1154
        %v1247 = vunpack.c.l.b16 %v1155
        %v1248 = vunpack.c.h.b16 %v1155
        %v1249 = vunpack.c.l.b16 %v1156
        %v1250 = vunpack.c.h.b16 %v1156
        %v1251 = vunpack.c.l.b16 %v1157
        %v1252 = vunpack.c.h.b16 %v1157
        %v1253 = vunpack.c.l.b16 %v1158
        %v1254 = vunpack.c.h.b16 %v1158
        %v1255 = vunpack.c.l.b16 %v1159
        %v1256 = vunpack.c.h.b16 %v1159
        %v1257 = vunpack.c.l.b16 %v1160
        %v1258 = vunpack.c.h.b16 %v1160
        %v1259 = vunpack.c.l.b16 %v1161
        %v1260 = vunpack.c.h.b16 %v1161
        %v1261 = vunpack.c.l.b16 %v1162
        %v1262 = vunpack.c.h.b16 %v1162
        %v1263 = vunpack.c.l.b16 %v1163
        %v1264 = vunpack.c.h.b16 %v1163
        %v1265 = vunpack.c.l.b16 %v1164
        %v1266 = vunpack.c.h.b16 %v1164
        %v1267 = vunpack.c.l.b16 %v1165
        %v1268 = vunpack.c.h.b16 %v1165
        %v1269 = vunpack.c.l.b16 %v1166
        %v1270 = vunpack.c.h.b16 %v1166
        %v1271 = vunpack.c.l.b16 %v1167
        %v1272 = vunpack.c.h.b16 %v1167
        %v1273 = vunpack.c.l.b16 %v1168
        %v1274 = vunpack.c.h.b16 %v1168
        %v1275 = vunpack.c.l.b16 %v1169
        %v1276 = vunpack.c.h.b16 %v1169
        %v1277 = vunpack.c.l.b16 %v1170
        %v1278 = vunpack.c.h.b16 %v1170
        %v1279 = vpack.c.b16 %v1217, %v1215
        %v1280 = vpack.c.b16 %v1218, %v1216
        %v1281 = vpack.c.b16 %v1221, %v1219
        %v1282 = vpack.c.b16 %v1222, %v1220
        %v1283 = vpack.c.b16 %v1225, %v1223
        %v1284 = vpack.c.b16 %v1226, %v1224
        %v1285 = vpack.c.b16 %v1229, %v1227
        %v1286 = vpack.c.b16 %v1230, %v1228
        %v1287 = vpack.c.b16 %v1233, %v1231
        %v1288 = vpack.c.b16 %v1234, %v1232
        %v1289 = vpack.c.b16 %v1237, %v1235
        %v1290 = vpack.c.b16 %v1238, %v1236
        %v1291 = vpack.c.b16 %v1241, %v1239
        %v1292 = vpack.c.b16 %v1242, %v1240
        %v1293 = vpack.c.b16 %v1245, %v1243
        %v1294 = vpack.c.b16 %v1246, %v1244
        %v1295 = vpack.c.b16 %v1249, %v1247
        %v1296 = vpack.c.b16 %v1250, %v1248
        %v1297 = vpack.c.b16 %v1253, %v1251
        %v1298 = vpack.c.b16 %v1254, %v1252
        %v1299 = vpack.c.b16 %v1257, %v1255
        %v1300 = vpack.c.b16 %v1258, %v1256
        %v1301 = vpack.c.b16 %v1261, %v1259
        %v1302 = vpack.c.b16 %v1262, %v1260
        %v1303 = vpack.c.b16 %v1265, %v1263
        %v1304 = vpack.c.b16 %v1266, %v1264
        %v1305 = vpack.c.b16 %v1269, %v1267
        %v1306 = vpack.c.b16 %v1270, %v1268
        %v1307 = vpack.c.b16 %v1273, %v1271
        %v1308 = vpack.c.b16 %v1274, %v1272
        %v1309 = vpack.c.b16 %v1277, %v1275
        %v1310 = vpack.c.b16 %v1278, %v1276
        %1343 = vmatprep.subr.bf16.mxu0 %v1280
        %1344 = vmatpush1.bf16.msra.mxu0 %v1279
        %1345 = vmatprep.subr.bf16.mxu0 %v1282
        %1346 = vmatpush1.bf16.msra.mxu0 %v1281
        %1347 = vmatprep.subr.bf16.mxu0 %v1284
        %1348 = vmatpush1.bf16.msra.mxu0 %v1283
        %1349 = vmatprep.subr.bf16.mxu0 %v1286
        %1350 = vmatpush1.bf16.msra.mxu0 %v1285
        %1351 = vmatprep.subr.bf16.mxu0 %v1288
        %1352 = vmatpush1.bf16.msra.mxu0 %v1287
        %1353 = vmatprep.subr.bf16.mxu0 %v1290
        %1354 = vmatpush1.bf16.msra.mxu0 %v1289
        %1355 = vmatprep.subr.bf16.mxu0 %v1292
        %1356 = vmatpush1.bf16.msra.mxu0 %v1291
        %1357 = vmatprep.subr.bf16.mxu0 %v1294
        %1358 = vmatpush1.bf16.msra.mxu0 %v1293
        %1359 = vmatprep.subr.bf16.mxu0 %v1296
        %1360 = vmatpush1.bf16.msra.mxu0 %v1295
        %1361 = vmatprep.subr.bf16.mxu0 %v1298
        %1362 = vmatpush1.bf16.msra.mxu0 %v1297
        %1363 = vmatprep.subr.bf16.mxu0 %v1300
        %1364 = vmatpush1.bf16.msra.mxu0 %v1299
        %1365 = vmatprep.subr.bf16.mxu0 %v1302
        %1366 = vmatpush1.bf16.msra.mxu0 %v1301
        %1367 = vmatprep.subr.bf16.mxu0 %v1304
        %1368 = vmatpush1.bf16.msra.mxu0 %v1303
        %1369 = vmatprep.subr.bf16.mxu0 %v1306
        %1370 = vmatpush1.bf16.msra.mxu0 %v1305
        %1371 = vmatprep.subr.bf16.mxu0 %v1308
        %1372 = vmatpush1.bf16.msra.mxu0 %v1307
        %1373 = vmatprep.subr.bf16.mxu0 %v1310
        %1374 = vmatpush1.bf16.msra.mxu0 %v1309
        %1375 = vmatprep.mubr.bf16.mxu0 %v1138
        %1376 = vmatmul.mubr.bf16.gmra.mrb[0].mxu0 %v1137
        %v1377 = vpop.f32.mrb[0].mxu0
        %v1378 = vadd.f32 %v1176, %v1377
        %v1379 = vpop.f32.mrb[0].mxu0
        %v1380 = vadd.f32 %v1180, %v1379
        %v1381 = vpop.f32.mrb[0].mxu0
        %v1382 = vadd.f32 %v1176, %v1381
        %v1383 = vpop.f32.mrb[0].mxu0
        %v1384 = vadd.f32 %v1180, %v1383
        %1385 = vdwg.mxu0
        %1387 = vset.pattern.permute.xlu0 0
        %1388 = vperm.xlu0 %1387, %v570
        %v1389 = vpop.permute.xlu0 %1388
        %1392 = vset.pattern.permute.xlu0 0
        %1393 = vperm.xlu0 %1392, %v572
        %v1394 = vpop.permute.xlu0 %1393
        %v1396 = vmul.f32 %v1389, %v551
        %v1397 = vmul.f32 %v1389, %v552
        %v1398 = vmul.f32 %v1394, %v553
        %v1399 = vmul.f32 %v1394, %v554
        %1401 = vset.pattern.permute.xlu0 0
        %1402 = vperm.xlu0 %1401, %v567
        %v1403 = vpop.permute.xlu0 %1402
        %1406 = vset.pattern.permute.xlu0 0
        %1407 = vperm.xlu0 %1406, %v568
        %v1408 = vpop.permute.xlu0 %1407
        %v1410 = vmul.f32 %v1403, %v1378
        %v1411 = vmul.f32 %v1403, %v1380
        %v1412 = vmul.f32 %v1408, %v1382
        %v1413 = vmul.f32 %v1408, %v1384
        %v1414 = vadd.f32 %v1396, %v1410
        %v1415 = vadd.f32 %v1397, %v1411
        %v1416 = vadd.f32 %v1398, %v1412
        %v1417 = vadd.f32 %v1399, %v1413
        %v1418 = vmul.f32 %v529, %v1414
        %v1419 = vmul.f32 %v530, %v1415
        %v1420 = vmul.f32 %v531, %v1416
        %v1421 = vmul.f32 %v532, %v1417
        %v1422 = vadd.f32 %v555, %v1418
        %v1423 = vadd.f32 %v556, %v1419
        %v1424 = vadd.f32 %v557, %v1420
        %v1425 = vadd.f32 %v558, %v1421
        %1426 = vst [vmem:[%s486] sm:$0xff] %v1422
        %1427 = vst [vmem:[%s486 + $0x8] sm:$0xff] %v1423
        %1428 = vst [vmem:[%s486 + $0x10] sm:$0xff] %v1424
        %1429 = vst [vmem:[%s486 + $0x18] sm:$0xff] %v1425
        %v1430 = vmul.f32 %v565, %v565
        %v1431 = vmul.f32 %v566, %v566
        %v1432 = vrcp.pop %v1430
        %v1433 = vmul.f32 %v561, %v1432
        %v1434 = vrcp.pop %v1431
        %v1435 = vmul.f32 %v562, %v1434
        %v1436 = vsub.f32 %v1422, %v511
        %v1437 = vsub.f32 %v1423, %v512
        %v1438 = vsub.f32 %v1424, %v513
        %v1439 = vsub.f32 %v1425, %v514
        %v1440 = vmul.f32 %v529, %v1436
        %v1441 = vmul.f32 %v530, %v1437
        %v1442 = vmul.f32 %v531, %v1438
        %v1443 = vmul.f32 %v532, %v1439
        %v1444 = vmul.f32 %v1440, %v1440
        %v1445 = vmul.f32 %v1441, %v1441
        %v1446 = vmul.f32 %v1442, %v1442
        %v1447 = vmul.f32 %v1443, %v1443
        %v1448 = vadd.f32 %v1444, %v1445
        %1449 = vadd.xlane.f32.xlu0 %v1448
        %v1450 = vpop.xlane.xlu0 %1449
        %v1451 = vadd.f32 %v1446, %v1447
        %1452 = vadd.xlane.f32.xlu0 %v1451
        %v1453 = vpop.xlane.xlu0 %1452
        %v1454 = vmul.f32 %v1450, %v1433
        %v1455 = vmul.f32 %v1453, %v1435
        %v1456 = vadd.f32 %v529, %v530
        %1457 = vadd.xlane.f32.xlu0 %v1456
        %v1458 = vpop.xlane.xlu0 %1457
        %v1459 = vadd.f32 %v531, %v532
        %1460 = vadd.xlane.f32.xlu0 %v1459
        %v1461 = vpop.xlane.xlu0 %1460
        %v1462 = vlaneseq
        %v1463 = vand.u32 %v1462, 127
        %vm1464 = vcmp.eq.s32.totalorder %v1463, 0
        %vm1465 = vcmp.eq.s32.totalorder %v1463, 1
        %v1466 = vsel %vm1465, %v1458, 0.0
        %v1467 = vsel %vm1465, %v1461, 0.0
        %1469 = vset.pattern.permute.xlu0 0
        %1470 = vperm.xlu0 %1469, %v1454
        %v1471 = vpop.permute.xlu0 %1470
        %1474 = vset.pattern.permute.xlu0 0
        %1475 = vperm.xlu0 %1474, %v1455
        %v1476 = vpop.permute.xlu0 %1475
        %v1478 = vsel %vm1464, %v1471, %v1466
        %v1479 = vsel %vm1464, %v1476, %v1467
        %1480 = vst [vmem:[%s493] sm:$0xff] %v1478
        %1481 = vst [vmem:[%s493 + $0x8] sm:$0xff] %v1479
        %s1482 = sand.u32 %s252, 1
        %s1483 = scalar_lea.sflag [#allocation5], %s1482
        %s1484 = sand.u32 %s252, 1
        %s1485 = smul.addr %s1484, 32
        %s1486 = scalar_lea.vmem [#allocation11], %s1485
        %s1487 = sand.u32 %s278, 1
        %s1488 = scalar_lea.sflag [#allocation13], %s1487
        %s1489 = sand.u32 %s278, 1
        %s1490 = smul.addr %s1489, 16
        %s1491 = scalar_lea.vmem [#allocation12], %s1490
        // Predicated region
        $region73: #{tpu_custom_call.1} parent=55 // pred_check
          %p1492 = pneg %p262
        $region74: #{tpu_custom_call.1} parent=55 // pred_check_branch
          %1494 = sbr.rel (%p1492) target = $region76
        $region75: #{tpu_custom_call.1} parent=55 // pred_region
          %s1495 = smul.u32 2, %s35
          %s1497 = ssub.s32 512, 512
          %1498 = vsyncadd %s1483, %s1497
          %s1499 = smul.addr %s1495, 2
          %s1500 = smul.addr %s1499, 128
          %s1501 = scalar_lea.hbm %s9, %s1500
          %s1502 = sshll.u32 %s1486, 4
          %s1503 = int_to_ptr.vmem [resolvable:$true] %s1502
          %1508 = dma.vmem_to_hbm [thread:$0]  %s1503, 512, %s1501, %s1483, 256, 256, 16
        $region76: #{tpu_custom_call.1} parent=55 // pred_fallthru
          _
        // Predicated region
        $region77: #{tpu_custom_call.1} parent=55 // pred_check
          %p1509 = pneg %p288
        $region78: #{tpu_custom_call.1} parent=55 // pred_check_branch
          %1511 = sbr.rel (%p1509) target = $region80
        $region79: #{tpu_custom_call.1} parent=55 // pred_region
          %s1512 = smul.u32 2, %s35
          %s1514 = ssub.s32 256, 256
          %1515 = vsyncadd %s1488, %s1514
          %s1516 = smul.addr %s1512, 128
          %s1517 = scalar_lea.hbm %s10, %s1516
          %s1518 = sshll.u32 %s1491, 4
          %s1519 = int_to_ptr.vmem [resolvable:$true] %s1518
          %1524 = dma.vmem_to_hbm [thread:$0]  %s1519, 256, %s1517, %s1488, 128, 128, 8
        $region80: #{tpu_custom_call.1} parent=55 // pred_fallthru
          _
      $region56: #{tpu_custom_call.1} parent=5 // pred_fallthru
        _
      %p1525 = scmp.le.s32.totalorder 2, %s30
      // Predicated region
      $region81: #{tpu_custom_call.1} parent=5 // pred_check
        %p1526 = pneg %p1525
      $region82: #{tpu_custom_call.1} parent=5 // pred_check_branch
        %1528 = sbr.rel (%p1526) target = $region84
      $region83: #{tpu_custom_call.1} parent=5 // pred_region
        %s1529 = ssub.s32 %s30, 2
        // Predicated region
        $region85: #{tpu_custom_call.1} parent=83 // pred_check
          %p1530 = pneg %p268
        $region86: #{tpu_custom_call.1} parent=83 // pred_check_branch
          %1532 = sbr.rel (%p1530) target = $region88
        $region87: #{tpu_custom_call.1} parent=83 // pred_region
          %s1533 = sand.u32 %s253, 1
          %s1534 = scalar_lea.sflag [#allocation5], %s1533
          %s1535 = sand.u32 %s253, 1
          %s1536 = smul.addr %s1535, 32
          %s1537 = scalar_lea.vmem [#allocation11], %s1536
          %1538 = dma.done %s1534, 512
        $region88: #{tpu_custom_call.1} parent=83 // pred_fallthru
          _
        // Predicated region
        $region89: #{tpu_custom_call.1} parent=83 // pred_check
          %p1539 = pneg %p294
        $region90: #{tpu_custom_call.1} parent=83 // pred_check_branch
          %1541 = sbr.rel (%p1539) target = $region92
        $region91: #{tpu_custom_call.1} parent=83 // pred_region
          %s1542 = sand.u32 %s279, 1
          %s1543 = scalar_lea.sflag [#allocation13], %s1542
          %s1544 = sand.u32 %s279, 1
          %s1545 = smul.addr %s1544, 16
          %s1546 = scalar_lea.vmem [#allocation12], %s1545
          %1547 = dma.done %s1543, 256
        $region92: #{tpu_custom_call.1} parent=83 // pred_fallthru
          _
      $region84: #{tpu_custom_call.1} parent=5 // pred_fallthru
        _
    $region6: #{tpu_custom_call.1} parent=1 // loop_footer
      %s34 = sadd.s32 1, %s30
    $region7: #{tpu_custom_call.1} parent=1 // loop_footer_branch
      %29 = sbr.rel target = $region3
    $region8: #{tpu_custom_call.1} parent=1 // loop_exit
      _
    %1548 = vsyncpa [#allocation4], 1
    %s1549 = scalar_lea.sflag [#allocation4], 1
    %1550 = vsyncpa %s1549, 1
    %1551 = vsyncpa [#allocation7], 1
    %s1552 = scalar_lea.sflag [#allocation7], 1
    %1553 = vsyncpa %s1552, 1
    %1554 = vsyncpa [#allocation10], 1
    %1555 = vsyncpa [#allocation5], 1
    %s1556 = scalar_lea.sflag [#allocation5], 1
    %1557 = vsyncpa %s1556, 1
    %1558 = vsyncpa [#allocation13], 1
    %s1559 = scalar_lea.sflag [#allocation13], 1
    %1560 = vsyncpa %s1559, 1

</llo_original>
